<compile_context>
chip_gen: v5e
topology: v5e:2x2
jax: 0.10.0
libtpu: 0.0.40
codegen_flags: <defaults>
</compile_context>

<pallas_src>
import functools
import math

import jax
import jax.numpy as jnp
import numpy as np
from jax import lax
from jax.experimental import pallas as pl
from jax.experimental.pallas import tpu as pltpu


def mmhca_kernel(x_ref, mcol_ref, mrow_ref, dw_ref, g_ref, bln_ref,
                 w_ref, b_ref, wp_ref, bp_ref, o_ref,
                 xpad, attn_scratch, *, n_head):
    # x_ref:    (1, T, C)      input slab for this batch element (channels on lanes)
    # mcol_ref: (1, T, 1)      float mask over time (column form)
    # mrow_ref: (1, 1, T)      float mask over time (row form, for the score matrix)
    # dw_ref:   (3, K, C)      depthwise conv taps for q/k/v
    # g_ref:    (3, 1, C)      LayerNorm weights      bln_ref: (3, 1, C) LayerNorm biases
    # w_ref:    (3, C, C)      1x1 q/k/v projections  b_ref:   (3, 1, C) their biases
    # wp_ref:   (C, C)         output projection      bp_ref:  (1, C)
    # o_ref:    (1, T, C)
    # xpad:     VMEM (T+2*pad, C)  zero-padded copy of x (boundary rows stay zero)
    # attn_scratch: VMEM (T, C)    per-head attention outputs assembled here
    T = x_ref.shape[1]
    C = x_ref.shape[2]
    K = dw_ref.shape[1]          # 3 for the stride-1 MaskedConv1D branches
    pad = K // 2                 # 1
    hc = C // n_head
    scale = 1.0 / math.sqrt(hc)
    eps = 1e-5

    x = x_ref[0]                 # (T, C)
    mcol = mcol_ref[0]           # (T, 1)
    mrow = mrow_ref[0]           # (1, T)

    # ---- zero-padded x in VMEM scratch (no concatenate / wrapper pad pass) ----
    zrow = jnp.zeros((pad, C), jnp.float32)
    xpad[0:pad, :] = zrow
    xpad[pad + T:pad + T + pad, :] = zrow
    xpad[pad:pad + T, :] = x
    # tap k reads x[t + k - pad] with zero boundaries
    taps = tuple(xpad[k:k + T, :] for k in range(K))

    def branch(idx):
        """depthwise conv3 -> * mask -> channel LayerNorm -> 1x1 projection."""
        w_dw = dw_ref[idx]                                  # (K, C)
        h = taps[0] * w_dw[0:1, :]
        for k in range(1, K):
            h = h + taps[k] * w_dw[k:k + 1, :]
        h = h * mcol                                        # MaskedConv1D masking
        mu = jnp.mean(h, axis=-1, keepdims=True)            # LayerNorm over channels
        r = h - mu
        sig = jnp.mean(r * r, axis=-1, keepdims=True)
        hn = r / jnp.sqrt(sig + eps)
        hn = hn * g_ref[idx] + bln_ref[idx]                 # affine (1, C)
        return jnp.dot(hn, w_ref[idx],
                       preferred_element_type=jnp.float32) + b_ref[idx]

    q = branch(0)
    k = branch(1)
    v = branch(2) * mcol          # v * kv_mask (applied before att @ v)

    # ---- multi-head attention; heads are contiguous channel groups ----
    neg = jnp.float32(-1e30)
    for h_i in range(n_head):
        lo = h_i * hc
        qh = q[:, lo:lo + hc] * scale                       # (T, hc)
        kh = k[:, lo:lo + hc]
        vh = v[:, lo:lo + hc]
        s = lax.dot_general(qh, kh, (((1,), (1,)), ((), ())),
                            preferred_element_type=jnp.float32)   # (T, T) = q @ k^T
        s = jnp.where(mrow > 0.0, s, neg)                   # mask key positions
        smax = jnp.max(s, axis=-1, keepdims=True)
        p = jnp.exp(s - smax)
        p = p / jnp.sum(p, axis=-1, keepdims=True)          # softmax over keys
        oh = jnp.dot(p, vh, preferred_element_type=jnp.float32)   # (T, hc)
        attn_scratch[:, lo:lo + hc] = oh                    # assemble heads in VMEM

    # ---- output projection + query mask ----
    out = jnp.dot(attn_scratch[...], wp_ref[...],
                  preferred_element_type=jnp.float32) + bp_ref[...]
    out = out * mcol
    o_ref[0] = out.astype(o_ref.dtype)


def masked_mmhca_forward(x_q, mask_q, params, n_head):
    """x_q: (B, C, T) float32; mask_q: (B, 1, T) bool.
    params:
      dw:    (3, K, C)  depthwise conv weights (q, k, v), [k, c] = torch weight[c, 0, k]
      ln_g:  (3, 1, C)  LayerNorm weights      ln_b: (3, 1, C)  LayerNorm biases
      w_qkv: (3, C, C)  1x1 conv weights stored (C_in, C_out); b_qkv: (3, 1, C)
      w_p:   (C, C)     output projection (C_in, C_out);       b_p:   (1, C)
    Returns (out (B, C, T), qx_mask (B, 1, T) bool) matching MaskedMMHCA.forward."""
    B, C, T = x_q.shape
    K = params["dw"].shape[1]
    assert K == 3 and K % 2 == 1, "kernel covers the default stride-1 (k=3) config"
    assert C % n_head == 0
    pad = K // 2

    # single transpose pass: channels -> lanes
    x_btc = jnp.transpose(x_q, (0, 2, 1))                            # (B, T, C)
    mask_col = jnp.transpose(mask_q.astype(x_q.dtype), (0, 2, 1))    # (B, T, 1)
    mask_row = mask_q.astype(x_q.dtype)                              # (B, 1, T)

    flops = B * (3 * 2 * T * K * C        # depthwise convs
                 + 4 * 2 * T * C * C      # q/k/v/out 1x1 projections
                 + 4 * T * T * C          # attention scores + att @ v
                 + 12 * T * C)            # layernorms / masking / softmax elementwise
    bytes_accessed = 4 * (2 * B * T * C + 2 * B * T
                          + 3 * K * C + 6 * C + 4 * C * C + 4 * C)
    cost = pl.CostEstimate(flops=flops,
                           transcendentals=B * n_head * T * T + 3 * B * T,
                           bytes_accessed=bytes_accessed)

    kernel = functools.partial(mmhca_kernel, n_head=n_head)
    out_btc = pl.pallas_call(
        kernel,
        out_shape=jax.ShapeDtypeStruct((B, T, C), x_q.dtype),
        grid_spec=pltpu.PrefetchScalarGridSpec(
            num_scalar_prefetch=0,
            grid=(B,),
            in_specs=[
                pl.BlockSpec((1, T, C), lambda b: (b, 0, 0)),
                pl.BlockSpec((1, T, 1), lambda b: (b, 0, 0)),
                pl.BlockSpec((1, 1, T), lambda b: (b, 0, 0)),
                pl.BlockSpec(params["dw"].shape, lambda b: (0, 0, 0)),
                pl.BlockSpec(params["ln_g"].shape, lambda b: (0, 0, 0)),
                pl.BlockSpec(params["ln_b"].shape, lambda b: (0, 0, 0)),
                pl.BlockSpec(params["w_qkv"].shape, lambda b: (0, 0, 0)),
                pl.BlockSpec(params["b_qkv"].shape, lambda b: (0, 0, 0)),
                pl.BlockSpec(params["w_p"].shape, lambda b: (0, 0)),
                pl.BlockSpec(params["b_p"].shape, lambda b: (0, 0)),
            ],
            out_specs=pl.BlockSpec((1, T, C), lambda b: (b, 0, 0)),
            scratch_shapes=[
                pltpu.VMEM((T + 2 * pad, C), jnp.float32),   # padded x
                pltpu.VMEM((T, C), jnp.float32),             # attention output
            ],
        ),
        compiler_params=pltpu.CompilerParams(
            dimension_semantics=("parallel",),
            vmem_limit_bytes=32 * 1024 * 1024),
        cost_estimate=cost,
    )(x_btc, mask_col, mask_row,
      params["dw"], params["ln_g"], params["ln_b"],
      params["w_qkv"], params["b_qkv"], params["w_p"], params["b_p"])

    out_nct = jnp.transpose(out_btc, (0, 2, 1))
    return out_nct, mask_q   # stride == 1 -> qx_mask is the (bool) input mask


def _reference(x, mask, params, n_head):
    """Pure-JAX reference mirroring the PyTorch MaskedMMHCA forward."""
    B, C, T = x.shape
    hc = C // n_head
    scale = 1.0 / math.sqrt(hc)
    mf = mask.astype(x.dtype)          # (B, 1, T)
    eps = 1e-5

    def dw_conv(xx, w_kc):             # depthwise conv, cross-correlation like torch
        w = jnp.transpose(w_kc, (1, 0))[:, None, :]   # (C, 1, K)
        return lax.conv_general_dilated(
            xx, w, (1,), [(1, 1)],
            dimension_numbers=("NCH", "OIH", "NCH"),
            feature_group_count=C)

    def layernorm(h, g, b):            # over channel dim=1
        mu = jnp.mean(h, axis=1, keepdims=True)
        r = h - mu
        sig = jnp.mean(r * r, axis=1, keepdims=True)
        out = r / jnp.sqrt(sig + eps)
        return out * g[0][None, :, None] + b[0][None, :, None]

    def proj1x1(h, w, b):              # w (C_in, C_out), b (1, C_out)
        return jnp.einsum("bit,io->bot", h, w) + b[0][None, :, None]

    outs = []
    for i in range(3):
        h = dw_conv(x, params["dw"][i]) * mf
        h = layernorm(h, params["ln_g"][i], params["ln_b"][i])
        outs.append(proj1x1(h, params["w_qkv"][i], params["b_qkv"][i]))
    q, k, v = outs

    def to_heads(z):                   # (B, C, T) -> (B, H, T, hc)
        return jnp.transpose(z.reshape(B, n_head, hc, T), (0, 1, 3, 2))

    q4, k4, v4 = to_heads(q), to_heads(k), to_heads(v)
    att = jnp.einsum("bhqc,bhkc->bhqk", q4 * scale, k4)
    att = jnp.where(mask[:, :, None, :], att, -jnp.inf)
    att = jax.nn.softmax(att, axis=-1)
    v4m = v4 * mf[:, :, :, None]
    o4 = jnp.einsum("bhqk,bhkc->bhqc", att, v4m)
    o = jnp.transpose(o4, (0, 1, 3, 2)).reshape(B, C, T)
    o = proj1x1(o, params["w_p"], params["b_p"]) * mf
    return o


if __name__ == "__main__":
    # MaskedMMHCA(n_embd=16, n_head=4), default strides/dropouts, self-attention path.
    B, n_embd, n_head, T = 2, 16, 4, 16
    K = 3

    key = jax.random.PRNGKey(0)
    keys = jax.random.split(key, 8)

    x = jax.random.normal(keys[0], (B, n_embd, T), dtype=jnp.float32)
    # (B, 1, T) bool mask; batch 1 has its last 5 time steps masked out
    valid = jnp.array([T, T - 5])
    mask = jnp.arange(T)[None, None, :] < valid[:, None, None]

    params = {
        "dw":    jax.random.normal(keys[1], (3, K, n_embd), jnp.float32) / math.sqrt(K),
        "ln_g":  1.0 + 0.1 * jax.random.normal(keys[2], (3, 1, n_embd), jnp.float32),
        "ln_b":  0.1 * jax.random.normal(keys[3], (3, 1, n_embd), jnp.float32),
        "w_qkv": jax.random.normal(keys[4], (3, n_embd, n_embd), jnp.float32) / math.sqrt(n_embd),
        "b_qkv": 0.1 * jax.random.normal(keys[5], (3, 1, n_embd), jnp.float32),
        "w_p":   jax.random.normal(keys[6], (n_embd, n_embd), jnp.float32) / math.sqrt(n_embd),
        "b_p":   0.1 * jax.random.normal(keys[7], (1, n_embd), jnp.float32),
    }

    out, out_mask = masked_mmhca_forward(x, mask, params, n_head)
    out = jax.block_until_ready(out)

    ref = _reference(x, mask, params, n_head)
    np.testing.assert_allclose(np.asarray(out), np.asarray(ref), rtol=1e-4, atol=1e-4)
    assert out.shape == (B, n_embd, T)
    assert out_mask.dtype == jnp.bool_ and out_mask.shape == (B, 1, T)

    print("KERNEL_OK")
</pallas_src>

<mosaic_0001>
module attributes {stable_mosaic.version = 11 : i64} {
  func.func @mmhca_kernel(%arg0: i32, %arg1: memref<1x16x16xf32, #tpu.memory_space<vmem>>, %arg2: memref<1x16x1xf32, #tpu.memory_space<vmem>>, %arg3: memref<1x1x16xf32, #tpu.memory_space<vmem>>, %arg4: memref<3x3x16xf32, #tpu.memory_space<vmem>>, %arg5: memref<3x1x16xf32, #tpu.memory_space<vmem>>, %arg6: memref<3x1x16xf32, #tpu.memory_space<vmem>>, %arg7: memref<3x16x16xf32, #tpu.memory_space<vmem>>, %arg8: memref<3x1x16xf32, #tpu.memory_space<vmem>>, %arg9: memref<16x16xf32, #tpu.memory_space<vmem>>, %arg10: memref<1x16xf32, #tpu.memory_space<vmem>>, %arg11: memref<1x16x16xf32, #tpu.memory_space<vmem>>, %arg12: memref<18x16xf32, #tpu.memory_space<vmem>>, %arg13: memref<16x16xf32, #tpu.memory_space<vmem>>) attributes {dimension_semantics = [#tpu.dimension_semantics<parallel>], iteration_bounds = array<i64: 2>, scalar_prefetch = 0 : i64, scratch_operands = 2 : i64, tpu.core_type = #tpu.core_type<tc>, window_params = [{transform_indices = @transform_0, window_bounds = array<i64: 1, 16, 16>}, {transform_indices = @transform_1, window_bounds = array<i64: 1, 16, 1>}, {transform_indices = @transform_2, window_bounds = array<i64: 1, 1, 16>}, {pipeline_mode = #tpu.pipeline_mode<synchronous>, transform_indices = @transform_3, window_bounds = array<i64: 3, 3, 16>}, {pipeline_mode = #tpu.pipeline_mode<synchronous>, transform_indices = @transform_4, window_bounds = array<i64: 3, 1, 16>}, {pipeline_mode = #tpu.pipeline_mode<synchronous>, transform_indices = @transform_5, window_bounds = array<i64: 3, 1, 16>}, {pipeline_mode = #tpu.pipeline_mode<synchronous>, transform_indices = @transform_6, window_bounds = array<i64: 3, 16, 16>}, {pipeline_mode = #tpu.pipeline_mode<synchronous>, transform_indices = @transform_7, window_bounds = array<i64: 3, 1, 16>}, {pipeline_mode = #tpu.pipeline_mode<synchronous>, transform_indices = @transform_8, window_bounds = array<i64: 16, 16>}, {pipeline_mode = #tpu.pipeline_mode<synchronous>, transform_indices = @transform_9, window_bounds = array<i64: 1, 16>}, {transform_indices = @transform_10, window_bounds = array<i64: 1, 16, 16>}]} {
    %c0 = arith.constant 0 : index
    %c0_0 = arith.constant 0 : index
    %c0_1 = arith.constant 0 : index
    %0 = vector.load %arg1[%c0, %c0_0, %c0_1] : memref<1x16x16xf32, #tpu.memory_space<vmem>>, vector<1x16x16xf32>
    %1 = vector.shape_cast %0 : vector<1x16x16xf32> to vector<16x16xf32>
    %c0_2 = arith.constant 0 : index
    %c0_3 = arith.constant 0 : index
    %c0_4 = arith.constant 0 : index
    %2 = vector.load %arg2[%c0_2, %c0_3, %c0_4] : memref<1x16x1xf32, #tpu.memory_space<vmem>>, vector<1x16x1xf32>
    %3 = vector.shape_cast %2 : vector<1x16x1xf32> to vector<16x1xf32>
    %c0_5 = arith.constant 0 : index
    %c0_6 = arith.constant 0 : index
    %c0_7 = arith.constant 0 : index
    %4 = vector.load %arg3[%c0_5, %c0_6, %c0_7] : memref<1x1x16xf32, #tpu.memory_space<vmem>>, vector<1x1x16xf32>
    %5 = vector.shape_cast %4 : vector<1x1x16xf32> to vector<1x16xf32>
    %cst = arith.constant 0.000000e+00 : f32
    %6 = vector.broadcast %cst : f32 to vector<1x16xf32>
    %c0_8 = arith.constant 0 : index
    %c0_9 = arith.constant 0 : index
    %7 = vector.load %arg12[%c0_8, %c0_9] : memref<18x16xf32, #tpu.memory_space<vmem>>, vector<1x16xf32>
    tpu.vector_store %arg12[%c0_8, %c0_9], %6 {strides = array<i32>} : memref<18x16xf32, #tpu.memory_space<vmem>>, vector<1x16xf32>,
    %c17 = arith.constant 17 : index
    %c0_10 = arith.constant 0 : index
    %8 = vector.load %arg12[%c17, %c0_10] : memref<18x16xf32, #tpu.memory_space<vmem>>, vector<1x16xf32>
    tpu.vector_store %arg12[%c17, %c0_10], %6 {strides = array<i32>} : memref<18x16xf32, #tpu.memory_space<vmem>>, vector<1x16xf32>,
    %c1 = arith.constant 1 : index
    %c0_11 = arith.constant 0 : index
    %9 = vector.load %arg12[%c1, %c0_11] : memref<18x16xf32, #tpu.memory_space<vmem>>, vector<16x16xf32>
    tpu.vector_store %arg12[%c1, %c0_11], %1 {strides = array<i32>} : memref<18x16xf32, #tpu.memory_space<vmem>>, vector<16x16xf32>,
    %c0_12 = arith.constant 0 : index
    %c0_13 = arith.constant 0 : index
    %10 = vector.load %arg12[%c0_12, %c0_13] : memref<18x16xf32, #tpu.memory_space<vmem>>, vector<16x16xf32>
    %c1_14 = arith.constant 1 : index
    %c0_15 = arith.constant 0 : index
    %11 = vector.load %arg12[%c1_14, %c0_15] : memref<18x16xf32, #tpu.memory_space<vmem>>, vector<16x16xf32>
    %c2 = arith.constant 2 : index
    %c0_16 = arith.constant 0 : index
    %12 = vector.load %arg12[%c2, %c0_16] : memref<18x16xf32, #tpu.memory_space<vmem>>, vector<16x16xf32>
    %c0_17 = arith.constant 0 : index
    %c0_18 = arith.constant 0 : index
    %c0_19 = arith.constant 0 : index
    %13 = vector.load %arg4[%c0_17, %c0_18, %c0_19] : memref<3x3x16xf32, #tpu.memory_space<vmem>>, vector<1x3x16xf32>
    %14 = vector.shape_cast %13 : vector<1x3x16xf32> to vector<3x16xf32>
    %15 = vector.extract_strided_slice %14 {offsets = [0, 0], sizes = [1, 16], strides = [1, 1]} : vector<3x16xf32> to vector<1x16xf32>
    %16 = vector.broadcast %15 : vector<1x16xf32> to vector<16x16xf32>
    %17 = arith.mulf %10, %16 : vector<16x16xf32>
    %18 = vector.extract_strided_slice %14 {offsets = [1, 0], sizes = [1, 16], strides = [1, 1]} : vector<3x16xf32> to vector<1x16xf32>
    %19 = vector.broadcast %18 : vector<1x16xf32> to vector<16x16xf32>
    %20 = arith.mulf %11, %19 : vector<16x16xf32>
    %21 = arith.addf %17, %20 : vector<16x16xf32>
    %22 = vector.extract_strided_slice %14 {offsets = [2, 0], sizes = [1, 16], strides = [1, 1]} : vector<3x16xf32> to vector<1x16xf32>
    %23 = vector.broadcast %22 : vector<1x16xf32> to vector<16x16xf32>
    %24 = arith.mulf %12, %23 : vector<16x16xf32>
    %25 = arith.addf %21, %24 : vector<16x16xf32>
    %26 = vector.broadcast %3 : vector<16x1xf32> to vector<16x16xf32>
    %27 = arith.mulf %25, %26 : vector<16x16xf32>
    %cst_20 = arith.constant dense<0.000000e+00> : vector<16xf32>
    %28 = vector.multi_reduction <add>, %27, %cst_20 [1] : vector<16x16xf32> to vector<16xf32>
    %29 = vector.shape_cast %28 : vector<16xf32> to vector<16x1xf32>
    %cst_21 = arith.constant 1.600000e+01 : f32
    %30 = vector.broadcast %cst_21 : f32 to vector<16x1xf32>
    %31 = arith.divf %29, %30 : vector<16x1xf32>
    %32 = vector.broadcast %31 : vector<16x1xf32> to vector<16x16xf32>
    %33 = arith.subf %27, %32 : vector<16x16xf32>
    %34 = arith.mulf %33, %33 : vector<16x16xf32>
    %cst_22 = arith.constant dense<0.000000e+00> : vector<16xf32>
    %35 = vector.multi_reduction <add>, %34, %cst_22 [1] : vector<16x16xf32> to vector<16xf32>
    %36 = vector.shape_cast %35 : vector<16xf32> to vector<16x1xf32>
    %cst_23 = arith.constant 1.600000e+01 : f32
    %37 = vector.broadcast %cst_23 : f32 to vector<16x1xf32>
    %38 = arith.divf %36, %37 : vector<16x1xf32>
    %cst_24 = arith.constant 9.99999974E-6 : f32
    %39 = vector.broadcast %cst_24 : f32 to vector<16x1xf32>
    %40 = arith.addf %38, %39 : vector<16x1xf32>
    %41 = math.sqrt %40 : vector<16x1xf32>
    %42 = vector.broadcast %41 : vector<16x1xf32> to vector<16x16xf32>
    %43 = arith.divf %33, %42 : vector<16x16xf32>
    %c0_25 = arith.constant 0 : index
    %c0_26 = arith.constant 0 : index
    %c0_27 = arith.constant 0 : index
    %44 = vector.load %arg5[%c0_25, %c0_26, %c0_27] : memref<3x1x16xf32, #tpu.memory_space<vmem>>, vector<1x1x16xf32>
    %45 = vector.shape_cast %44 : vector<1x1x16xf32> to vector<1x16xf32>
    %46 = vector.broadcast %45 : vector<1x16xf32> to vector<16x16xf32>
    %47 = arith.mulf %43, %46 : vector<16x16xf32>
    %c0_28 = arith.constant 0 : index
    %c0_29 = arith.constant 0 : index
    %c0_30 = arith.constant 0 : index
    %48 = vector.load %arg6[%c0_28, %c0_29, %c0_30] : memref<3x1x16xf32, #tpu.memory_space<vmem>>, vector<1x1x16xf32>
    %49 = vector.shape_cast %48 : vector<1x1x16xf32> to vector<1x16xf32>
    %50 = vector.broadcast %49 : vector<1x16xf32> to vector<16x16xf32>
    %51 = arith.addf %47, %50 : vector<16x16xf32>
    %c0_31 = arith.constant 0 : index
    %c0_32 = arith.constant 0 : index
    %c0_33 = arith.constant 0 : index
    %52 = vector.load %arg7[%c0_31, %c0_32, %c0_33] : memref<3x16x16xf32, #tpu.memory_space<vmem>>, vector<1x16x16xf32>
    %53 = vector.shape_cast %52 : vector<1x16x16xf32> to vector<16x16xf32>
    %cst_34 = arith.constant dense<0.000000e+00> : vector<16x16xf32>
    %54 = tpu.matmul %51, %53, %cst_34 {dimension_numbers = #tpu.dot_dimension_numbers<[1], [0], [0], [1], [0, 0, 1, 1], [], []>} : vector<16x16xf32>, vector<16x16xf32>, vector<16x16xf32> -> vector<16x16xf32>
    %c0_35 = arith.constant 0 : index
    %c0_36 = arith.constant 0 : index
    %c0_37 = arith.constant 0 : index
    %55 = vector.load %arg8[%c0_35, %c0_36, %c0_37] : memref<3x1x16xf32, #tpu.memory_space<vmem>>, vector<1x1x16xf32>
    %56 = vector.shape_cast %55 : vector<1x1x16xf32> to vector<1x16xf32>
    %57 = vector.broadcast %56 : vector<1x16xf32> to vector<16x16xf32>
    %58 = arith.addf %54, %57 : vector<16x16xf32>
    %c1_38 = arith.constant 1 : index
    %c0_39 = arith.constant 0 : index
    %c0_40 = arith.constant 0 : index
    %59 = vector.load %arg4[%c1_38, %c0_39, %c0_40] : memref<3x3x16xf32, #tpu.memory_space<vmem>>, vector<1x3x16xf32>
    %60 = vector.shape_cast %59 : vector<1x3x16xf32> to vector<3x16xf32>
    %61 = vector.extract_strided_slice %60 {offsets = [0, 0], sizes = [1, 16], strides = [1, 1]} : vector<3x16xf32> to vector<1x16xf32>
    %62 = vector.broadcast %61 : vector<1x16xf32> to vector<16x16xf32>
    %63 = arith.mulf %10, %62 : vector<16x16xf32>
    %64 = vector.extract_strided_slice %60 {offsets = [1, 0], sizes = [1, 16], strides = [1, 1]} : vector<3x16xf32> to vector<1x16xf32>
    %65 = vector.broadcast %64 : vector<1x16xf32> to vector<16x16xf32>
    %66 = arith.mulf %11, %65 : vector<16x16xf32>
    %67 = arith.addf %63, %66 : vector<16x16xf32>
    %68 = vector.extract_strided_slice %60 {offsets = [2, 0], sizes = [1, 16], strides = [1, 1]} : vector<3x16xf32> to vector<1x16xf32>
    %69 = vector.broadcast %68 : vector<1x16xf32> to vector<16x16xf32>
    %70 = arith.mulf %12, %69 : vector<16x16xf32>
    %71 = arith.addf %67, %70 : vector<16x16xf32>
    %72 = vector.broadcast %3 : vector<16x1xf32> to vector<16x16xf32>
    %73 = arith.mulf %71, %72 : vector<16x16xf32>
    %cst_41 = arith.constant dense<0.000000e+00> : vector<16xf32>
    %74 = vector.multi_reduction <add>, %73, %cst_41 [1] : vector<16x16xf32> to vector<16xf32>
    %75 = vector.shape_cast %74 : vector<16xf32> to vector<16x1xf32>
    %cst_42 = arith.constant 1.600000e+01 : f32
    %76 = vector.broadcast %cst_42 : f32 to vector<16x1xf32>
    %77 = arith.divf %75, %76 : vector<16x1xf32>
    %78 = vector.broadcast %77 : vector<16x1xf32> to vector<16x16xf32>
    %79 = arith.subf %73, %78 : vector<16x16xf32>
    %80 = arith.mulf %79, %79 : vector<16x16xf32>
    %cst_43 = arith.constant dense<0.000000e+00> : vector<16xf32>
    %81 = vector.multi_reduction <add>, %80, %cst_43 [1] : vector<16x16xf32> to vector<16xf32>
    %82 = vector.shape_cast %81 : vector<16xf32> to vector<16x1xf32>
    %cst_44 = arith.constant 1.600000e+01 : f32
    %83 = vector.broadcast %cst_44 : f32 to vector<16x1xf32>
    %84 = arith.divf %82, %83 : vector<16x1xf32>
    %cst_45 = arith.constant 9.99999974E-6 : f32
    %85 = vector.broadcast %cst_45 : f32 to vector<16x1xf32>
    %86 = arith.addf %84, %85 : vector<16x1xf32>
    %87 = math.sqrt %86 : vector<16x1xf32>
    %88 = vector.broadcast %87 : vector<16x1xf32> to vector<16x16xf32>
    %89 = arith.divf %79, %88 : vector<16x16xf32>
    %c1_46 = arith.constant 1 : index
    %c0_47 = arith.constant 0 : index
    %c0_48 = arith.constant 0 : index
    %90 = vector.load %arg5[%c1_46, %c0_47, %c0_48] : memref<3x1x16xf32, #tpu.memory_space<vmem>>, vector<1x1x16xf32>
    %91 = vector.shape_cast %90 : vector<1x1x16xf32> to vector<1x16xf32>
    %92 = vector.broadcast %91 : vector<1x16xf32> to vector<16x16xf32>
    %93 = arith.mulf %89, %92 : vector<16x16xf32>
    %c1_49 = arith.constant 1 : index
    %c0_50 = arith.constant 0 : index
    %c0_51 = arith.constant 0 : index
    %94 = vector.load %arg6[%c1_49, %c0_50, %c0_51] : memref<3x1x16xf32, #tpu.memory_space<vmem>>, vector<1x1x16xf32>
    %95 = vector.shape_cast %94 : vector<1x1x16xf32> to vector<1x16xf32>
    %96 = vector.broadcast %95 : vector<1x16xf32> to vector<16x16xf32>
    %97 = arith.addf %93, %96 : vector<16x16xf32>
    %c1_52 = arith.constant 1 : index
    %c0_53 = arith.constant 0 : index
    %c0_54 = arith.constant 0 : index
    %98 = vector.load %arg7[%c1_52, %c0_53, %c0_54] : memref<3x16x16xf32, #tpu.memory_space<vmem>>, vector<1x16x16xf32>
    %99 = vector.shape_cast %98 : vector<1x16x16xf32> to vector<16x16xf32>
    %cst_55 = arith.constant dense<0.000000e+00> : vector<16x16xf32>
    %100 = tpu.matmul %97, %99, %cst_55 {dimension_numbers = #tpu.dot_dimension_numbers<[1], [0], [0], [1], [0, 0, 1, 1], [], []>} : vector<16x16xf32>, vector<16x16xf32>, vector<16x16xf32> -> vector<16x16xf32>
    %c1_56 = arith.constant 1 : index
    %c0_57 = arith.constant 0 : index
    %c0_58 = arith.constant 0 : index
    %101 = vector.load %arg8[%c1_56, %c0_57, %c0_58] : memref<3x1x16xf32, #tpu.memory_space<vmem>>, vector<1x1x16xf32>
    %102 = vector.shape_cast %101 : vector<1x1x16xf32> to vector<1x16xf32>
    %103 = vector.broadcast %102 : vector<1x16xf32> to vector<16x16xf32>
    %104 = arith.addf %100, %103 : vector<16x16xf32>
    %c2_59 = arith.constant 2 : index
    %c0_60 = arith.constant 0 : index
    %c0_61 = arith.constant 0 : index
    %105 = vector.load %arg4[%c2_59, %c0_60, %c0_61] : memref<3x3x16xf32, #tpu.memory_space<vmem>>, vector<1x3x16xf32>
    %106 = vector.shape_cast %105 : vector<1x3x16xf32> to vector<3x16xf32>
    %107 = vector.extract_strided_slice %106 {offsets = [0, 0], sizes = [1, 16], strides = [1, 1]} : vector<3x16xf32> to vector<1x16xf32>
    %108 = vector.broadcast %107 : vector<1x16xf32> to vector<16x16xf32>
    %109 = arith.mulf %10, %108 : vector<16x16xf32>
    %110 = vector.extract_strided_slice %106 {offsets = [1, 0], sizes = [1, 16], strides = [1, 1]} : vector<3x16xf32> to vector<1x16xf32>
    %111 = vector.broadcast %110 : vector<1x16xf32> to vector<16x16xf32>
    %112 = arith.mulf %11, %111 : vector<16x16xf32>
    %113 = arith.addf %109, %112 : vector<16x16xf32>
    %114 = vector.extract_strided_slice %106 {offsets = [2, 0], sizes = [1, 16], strides = [1, 1]} : vector<3x16xf32> to vector<1x16xf32>
    %115 = vector.broadcast %114 : vector<1x16xf32> to vector<16x16xf32>
    %116 = arith.mulf %12, %115 : vector<16x16xf32>
    %117 = arith.addf %113, %116 : vector<16x16xf32>
    %118 = vector.broadcast %3 : vector<16x1xf32> to vector<16x16xf32>
    %119 = arith.mulf %117, %118 : vector<16x16xf32>
    %cst_62 = arith.constant dense<0.000000e+00> : vector<16xf32>
    %120 = vector.multi_reduction <add>, %119, %cst_62 [1] : vector<16x16xf32> to vector<16xf32>
    %121 = vector.shape_cast %120 : vector<16xf32> to vector<16x1xf32>
    %cst_63 = arith.constant 1.600000e+01 : f32
    %122 = vector.broadcast %cst_63 : f32 to vector<16x1xf32>
    %123 = arith.divf %121, %122 : vector<16x1xf32>
    %124 = vector.broadcast %123 : vector<16x1xf32> to vector<16x16xf32>
    %125 = arith.subf %119, %124 : vector<16x16xf32>
    %126 = arith.mulf %125, %125 : vector<16x16xf32>
    %cst_64 = arith.constant dense<0.000000e+00> : vector<16xf32>
    %127 = vector.multi_reduction <add>, %126, %cst_64 [1] : vector<16x16xf32> to vector<16xf32>
    %128 = vector.shape_cast %127 : vector<16xf32> to vector<16x1xf32>
    %cst_65 = arith.constant 1.600000e+01 : f32
    %129 = vector.broadcast %cst_65 : f32 to vector<16x1xf32>
    %130 = arith.divf %128, %129 : vector<16x1xf32>
    %cst_66 = arith.constant 9.99999974E-6 : f32
    %131 = vector.broadcast %cst_66 : f32 to vector<16x1xf32>
    %132 = arith.addf %130, %131 : vector<16x1xf32>
    %133 = math.sqrt %132 : vector<16x1xf32>
    %134 = vector.broadcast %133 : vector<16x1xf32> to vector<16x16xf32>
    %135 = arith.divf %125, %134 : vector<16x16xf32>
    %c2_67 = arith.constant 2 : index
    %c0_68 = arith.constant 0 : index
    %c0_69 = arith.constant 0 : index
    %136 = vector.load %arg5[%c2_67, %c0_68, %c0_69] : memref<3x1x16xf32, #tpu.memory_space<vmem>>, vector<1x1x16xf32>
    %137 = vector.shape_cast %136 : vector<1x1x16xf32> to vector<1x16xf32>
    %138 = vector.broadcast %137 : vector<1x16xf32> to vector<16x16xf32>
    %139 = arith.mulf %135, %138 : vector<16x16xf32>
    %c2_70 = arith.constant 2 : index
    %c0_71 = arith.constant 0 : index
    %c0_72 = arith.constant 0 : index
    %140 = vector.load %arg6[%c2_70, %c0_71, %c0_72] : memref<3x1x16xf32, #tpu.memory_space<vmem>>, vector<1x1x16xf32>
    %141 = vector.shape_cast %140 : vector<1x1x16xf32> to vector<1x16xf32>
    %142 = vector.broadcast %141 : vector<1x16xf32> to vector<16x16xf32>
    %143 = arith.addf %139, %142 : vector<16x16xf32>
    %c2_73 = arith.constant 2 : index
    %c0_74 = arith.constant 0 : index
    %c0_75 = arith.constant 0 : index
    %144 = vector.load %arg7[%c2_73, %c0_74, %c0_75] : memref<3x16x16xf32, #tpu.memory_space<vmem>>, vector<1x16x16xf32>
    %145 = vector.shape_cast %144 : vector<1x16x16xf32> to vector<16x16xf32>
    %cst_76 = arith.constant dense<0.000000e+00> : vector<16x16xf32>
    %146 = tpu.matmul %143, %145, %cst_76 {dimension_numbers = #tpu.dot_dimension_numbers<[1], [0], [0], [1], [0, 0, 1, 1], [], []>} : vector<16x16xf32>, vector<16x16xf32>, vector<16x16xf32> -> vector<16x16xf32>
    %c2_77 = arith.constant 2 : index
    %c0_78 = arith.constant 0 : index
    %c0_79 = arith.constant 0 : index
    %147 = vector.load %arg8[%c2_77, %c0_78, %c0_79] : memref<3x1x16xf32, #tpu.memory_space<vmem>>, vector<1x1x16xf32>
    %148 = vector.shape_cast %147 : vector<1x1x16xf32> to vector<1x16xf32>
    %149 = vector.broadcast %148 : vector<1x16xf32> to vector<16x16xf32>
    %150 = arith.addf %146, %149 : vector<16x16xf32>
    %151 = vector.broadcast %3 : vector<16x1xf32> to vector<16x16xf32>
    %152 = arith.mulf %150, %151 : vector<16x16xf32>
    %153 = vector.extract_strided_slice %58 {offsets = [0, 0], sizes = [16, 4], strides = [1, 1]} : vector<16x16xf32> to vector<16x4xf32>
    %cst_80 = arith.constant 5.000000e-01 : f32
    %154 = vector.broadcast %cst_80 : f32 to vector<16x4xf32>
    %155 = arith.mulf %153, %154 : vector<16x4xf32>
    %156 = vector.extract_strided_slice %104 {offsets = [0, 0], sizes = [16, 4], strides = [1, 1]} : vector<16x16xf32> to vector<16x4xf32>
    %157 = vector.extract_strided_slice %152 {offsets = [0, 0], sizes = [16, 4], strides = [1, 1]} : vector<16x16xf32> to vector<16x4xf32>
    %cst_81 = arith.constant dense<0.000000e+00> : vector<16x16xf32>
    %158 = tpu.matmul %155, %156, %cst_81 {dimension_numbers = #tpu.dot_dimension_numbers<[1], [1], [0], [0], [0, 0, 1, 0], [], []>} : vector<16x4xf32>, vector<16x4xf32>, vector<16x16xf32> -> vector<16x16xf32>
    %cst_82 = arith.constant 0.000000e+00 : f32
    %159 = vector.broadcast %cst_82 : f32 to vector<1x16xf32>
    %160 = arith.cmpf ogt, %5, %159 : vector<1x16xf32>
    %cst_83 = arith.constant -1.000000e+30 : f32
    %161 = vector.shape_cast %160 : vector<1x16xi1> to vector<1x16xi1>
    %162 = vector.broadcast %161 : vector<1x16xi1> to vector<16x16xi1>
    %163 = vector.broadcast %cst_83 : f32 to vector<16x16xf32>
    %164 = arith.select %162, %158, %163 : vector<16x16xi1>, vector<16x16xf32>
    %cst_84 = arith.constant dense<0xFF800000> : vector<16xf32>
    %165 = vector.multi_reduction <maximumf>, %164, %cst_84 [1] : vector<16x16xf32> to vector<16xf32>
    %166 = vector.shape_cast %165 : vector<16xf32> to vector<16x1xf32>
    %167 = vector.broadcast %166 : vector<16x1xf32> to vector<16x16xf32>
    %168 = arith.subf %164, %167 : vector<16x16xf32>
    %169 = math.exp %168 : vector<16x16xf32>
    %cst_85 = arith.constant dense<0.000000e+00> : vector<16xf32>
    %170 = vector.multi_reduction <add>, %169, %cst_85 [1] : vector<16x16xf32> to vector<16xf32>
    %171 = vector.shape_cast %170 : vector<16xf32> to vector<16x1xf32>
    %172 = vector.broadcast %171 : vector<16x1xf32> to vector<16x16xf32>
    %173 = arith.divf %169, %172 : vector<16x16xf32>
    %cst_86 = arith.constant dense<0.000000e+00> : vector<16x4xf32>
    %174 = tpu.matmul %173, %157, %cst_86 {dimension_numbers = #tpu.dot_dimension_numbers<[1], [0], [0], [1], [0, 0, 1, 1], [], []>} : vector<16x16xf32>, vector<16x4xf32>, vector<16x4xf32> -> vector<16x4xf32>
    %c0_87 = arith.constant 0 : index
    %c0_88 = arith.constant 0 : index
    %175 = vector.load %arg13[%c0_87, %c0_88] : memref<16x16xf32, #tpu.memory_space<vmem>>, vector<16x4xf32>
    tpu.vector_store %arg13[%c0_87, %c0_88], %174 {strides = array<i32>} : memref<16x16xf32, #tpu.memory_space<vmem>>, vector<16x4xf32>,
    %176 = vector.extract_strided_slice %58 {offsets = [0, 4], sizes = [16, 4], strides = [1, 1]} : vector<16x16xf32> to vector<16x4xf32>
    %cst_89 = arith.constant 5.000000e-01 : f32
    %177 = vector.broadcast %cst_89 : f32 to vector<16x4xf32>
    %178 = arith.mulf %176, %177 : vector<16x4xf32>
    %179 = vector.extract_strided_slice %104 {offsets = [0, 4], sizes = [16, 4], strides = [1, 1]} : vector<16x16xf32> to vector<16x4xf32>
    %180 = vector.extract_strided_slice %152 {offsets = [0, 4], sizes = [16, 4], strides = [1, 1]} : vector<16x16xf32> to vector<16x4xf32>
    %cst_90 = arith.constant dense<0.000000e+00> : vector<16x16xf32>
    %181 = tpu.matmul %178, %179, %cst_90 {dimension_numbers = #tpu.dot_dimension_numbers<[1], [1], [0], [0], [0, 0, 1, 0], [], []>} : vector<16x4xf32>, vector<16x4xf32>, vector<16x16xf32> -> vector<16x16xf32>
    %cst_91 = arith.constant 0.000000e+00 : f32
    %182 = vector.broadcast %cst_91 : f32 to vector<1x16xf32>
    %183 = arith.cmpf ogt, %5, %182 : vector<1x16xf32>
    %cst_92 = arith.constant -1.000000e+30 : f32
    %184 = vector.shape_cast %183 : vector<1x16xi1> to vector<1x16xi1>
    %185 = vector.broadcast %184 : vector<1x16xi1> to vector<16x16xi1>
    %186 = vector.broadcast %cst_92 : f32 to vector<16x16xf32>
    %187 = arith.select %185, %181, %186 : vector<16x16xi1>, vector<16x16xf32>
    %cst_93 = arith.constant dense<0xFF800000> : vector<16xf32>
    %188 = vector.multi_reduction <maximumf>, %187, %cst_93 [1] : vector<16x16xf32> to vector<16xf32>
    %189 = vector.shape_cast %188 : vector<16xf32> to vector<16x1xf32>
    %190 = vector.broadcast %189 : vector<16x1xf32> to vector<16x16xf32>
    %191 = arith.subf %187, %190 : vector<16x16xf32>
    %192 = math.exp %191 : vector<16x16xf32>
    %cst_94 = arith.constant dense<0.000000e+00> : vector<16xf32>
    %193 = vector.multi_reduction <add>, %192, %cst_94 [1] : vector<16x16xf32> to vector<16xf32>
    %194 = vector.shape_cast %193 : vector<16xf32> to vector<16x1xf32>
    %195 = vector.broadcast %194 : vector<16x1xf32> to vector<16x16xf32>
    %196 = arith.divf %192, %195 : vector<16x16xf32>
    %cst_95 = arith.constant dense<0.000000e+00> : vector<16x4xf32>
    %197 = tpu.matmul %196, %180, %cst_95 {dimension_numbers = #tpu.dot_dimension_numbers<[1], [0], [0], [1], [0, 0, 1, 1], [], []>} : vector<16x16xf32>, vector<16x4xf32>, vector<16x4xf32> -> vector<16x4xf32>
    %c0_96 = arith.constant 0 : index
    %c4 = arith.constant 4 : index
    %198 = vector.load %arg13[%c0_96, %c4] : memref<16x16xf32, #tpu.memory_space<vmem>>, vector<16x4xf32>
    tpu.vector_store %arg13[%c0_96, %c4], %197 {strides = array<i32>} : memref<16x16xf32, #tpu.memory_space<vmem>>, vector<16x4xf32>,
    %199 = vector.extract_strided_slice %58 {offsets = [0, 8], sizes = [16, 4], strides = [1, 1]} : vector<16x16xf32> to vector<16x4xf32>
    %cst_97 = arith.constant 5.000000e-01 : f32
    %200 = vector.broadcast %cst_97 : f32 to vector<16x4xf32>
    %201 = arith.mulf %199, %200 : vector<16x4xf32>
    %202 = vector.extract_strided_slice %104 {offsets = [0, 8], sizes = [16, 4], strides = [1, 1]} : vector<16x16xf32> to vector<16x4xf32>
    %203 = vector.extract_strided_slice %152 {offsets = [0, 8], sizes = [16, 4], strides = [1, 1]} : vector<16x16xf32> to vector<16x4xf32>
    %cst_98 = arith.constant dense<0.000000e+00> : vector<16x16xf32>
    %204 = tpu.matmul %201, %202, %cst_98 {dimension_numbers = #tpu.dot_dimension_numbers<[1], [1], [0], [0], [0, 0, 1, 0], [], []>} : vector<16x4xf32>, vector<16x4xf32>, vector<16x16xf32> -> vector<16x16xf32>
    %cst_99 = arith.constant 0.000000e+00 : f32
    %205 = vector.broadcast %cst_99 : f32 to vector<1x16xf32>
    %206 = arith.cmpf ogt, %5, %205 : vector<1x16xf32>
    %cst_100 = arith.constant -1.000000e+30 : f32
    %207 = vector.shape_cast %206 : vector<1x16xi1> to vector<1x16xi1>
    %208 = vector.broadcast %207 : vector<1x16xi1> to vector<16x16xi1>
    %209 = vector.broadcast %cst_100 : f32 to vector<16x16xf32>
    %210 = arith.select %208, %204, %209 : vector<16x16xi1>, vector<16x16xf32>
    %cst_101 = arith.constant dense<0xFF800000> : vector<16xf32>
    %211 = vector.multi_reduction <maximumf>, %210, %cst_101 [1] : vector<16x16xf32> to vector<16xf32>
    %212 = vector.shape_cast %211 : vector<16xf32> to vector<16x1xf32>
    %213 = vector.broadcast %212 : vector<16x1xf32> to vector<16x16xf32>
    %214 = arith.subf %210, %213 : vector<16x16xf32>
    %215 = math.exp %214 : vector<16x16xf32>
    %cst_102 = arith.constant dense<0.000000e+00> : vector<16xf32>
    %216 = vector.multi_reduction <add>, %215, %cst_102 [1] : vector<16x16xf32> to vector<16xf32>
    %217 = vector.shape_cast %216 : vector<16xf32> to vector<16x1xf32>
    %218 = vector.broadcast %217 : vector<16x1xf32> to vector<16x16xf32>
    %219 = arith.divf %215, %218 : vector<16x16xf32>
    %cst_103 = arith.constant dense<0.000000e+00> : vector<16x4xf32>
    %220 = tpu.matmul %219, %203, %cst_103 {dimension_numbers = #tpu.dot_dimension_numbers<[1], [0], [0], [1], [0, 0, 1, 1], [], []>} : vector<16x16xf32>, vector<16x4xf32>, vector<16x4xf32> -> vector<16x4xf32>
    %c0_104 = arith.constant 0 : index
    %c8 = arith.constant 8 : index
    %221 = vector.load %arg13[%c0_104, %c8] : memref<16x16xf32, #tpu.memory_space<vmem>>, vector<16x4xf32>
    tpu.vector_store %arg13[%c0_104, %c8], %220 {strides = array<i32>} : memref<16x16xf32, #tpu.memory_space<vmem>>, vector<16x4xf32>,
    %222 = vector.extract_strided_slice %58 {offsets = [0, 12], sizes = [16, 4], strides = [1, 1]} : vector<16x16xf32> to vector<16x4xf32>
    %cst_105 = arith.constant 5.000000e-01 : f32
    %223 = vector.broadcast %cst_105 : f32 to vector<16x4xf32>
    %224 = arith.mulf %222, %223 : vector<16x4xf32>
    %225 = vector.extract_strided_slice %104 {offsets = [0, 12], sizes = [16, 4], strides = [1, 1]} : vector<16x16xf32> to vector<16x4xf32>
    %226 = vector.extract_strided_slice %152 {offsets = [0, 12], sizes = [16, 4], strides = [1, 1]} : vector<16x16xf32> to vector<16x4xf32>
    %cst_106 = arith.constant dense<0.000000e+00> : vector<16x16xf32>
    %227 = tpu.matmul %224, %225, %cst_106 {dimension_numbers = #tpu.dot_dimension_numbers<[1], [1], [0], [0], [0, 0, 1, 0], [], []>} : vector<16x4xf32>, vector<16x4xf32>, vector<16x16xf32> -> vector<16x16xf32>
    %cst_107 = arith.constant 0.000000e+00 : f32
    %228 = vector.broadcast %cst_107 : f32 to vector<1x16xf32>
    %229 = arith.cmpf ogt, %5, %228 : vector<1x16xf32>
    %cst_108 = arith.constant -1.000000e+30 : f32
    %230 = vector.shape_cast %229 : vector<1x16xi1> to vector<1x16xi1>
    %231 = vector.broadcast %230 : vector<1x16xi1> to vector<16x16xi1>
    %232 = vector.broadcast %cst_108 : f32 to vector<16x16xf32>
    %233 = arith.select %231, %227, %232 : vector<16x16xi1>, vector<16x16xf32>
    %cst_109 = arith.constant dense<0xFF800000> : vector<16xf32>
    %234 = vector.multi_reduction <maximumf>, %233, %cst_109 [1] : vector<16x16xf32> to vector<16xf32>
    %235 = vector.shape_cast %234 : vector<16xf32> to vector<16x1xf32>
    %236 = vector.broadcast %235 : vector<16x1xf32> to vector<16x16xf32>
    %237 = arith.subf %233, %236 : vector<16x16xf32>
    %238 = math.exp %237 : vector<16x16xf32>
    %cst_110 = arith.constant dense<0.000000e+00> : vector<16xf32>
    %239 = vector.multi_reduction <add>, %238, %cst_110 [1] : vector<16x16xf32> to vector<16xf32>
    %240 = vector.shape_cast %239 : vector<16xf32> to vector<16x1xf32>
    %241 = vector.broadcast %240 : vector<16x1xf32> to vector<16x16xf32>
    %242 = arith.divf %238, %241 : vector<16x16xf32>
    %cst_111 = arith.constant dense<0.000000e+00> : vector<16x4xf32>
    %243 = tpu.matmul %242, %226, %cst_111 {dimension_numbers = #tpu.dot_dimension_numbers<[1], [0], [0], [1], [0, 0, 1, 1], [], []>} : vector<16x16xf32>, vector<16x4xf32>, vector<16x4xf32> -> vector<16x4xf32>
    %c0_112 = arith.constant 0 : index
    %c12 = arith.constant 12 : index
    %244 = vector.load %arg13[%c0_112, %c12] : memref<16x16xf32, #tpu.memory_space<vmem>>, vector<16x4xf32>
    tpu.vector_store %arg13[%c0_112, %c12], %243 {strides = array<i32>} : memref<16x16xf32, #tpu.memory_space<vmem>>, vector<16x4xf32>,
    %c0_113 = arith.constant 0 : index
    %c0_114 = arith.constant 0 : index
    %245 = vector.load %arg13[%c0_113, %c0_114] : memref<16x16xf32, #tpu.memory_space<vmem>>, vector<16x16xf32>
    %c0_115 = arith.constant 0 : index
    %c0_116 = arith.constant 0 : index
    %246 = vector.load %arg9[%c0_115, %c0_116] : memref<16x16xf32, #tpu.memory_space<vmem>>, vector<16x16xf32>
    %cst_117 = arith.constant dense<0.000000e+00> : vector<16x16xf32>
    %247 = tpu.matmul %245, %246, %cst_117 {dimension_numbers = #tpu.dot_dimension_numbers<[1], [0], [0], [1], [0, 0, 1, 1], [], []>} : vector<16x16xf32>, vector<16x16xf32>, vector<16x16xf32> -> vector<16x16xf32>
    %c0_118 = arith.constant 0 : index
    %c0_119 = arith.constant 0 : index
    %248 = vector.load %arg10[%c0_118, %c0_119] : memref<1x16xf32, #tpu.memory_space<vmem>>, vector<1x16xf32>
    %249 = vector.broadcast %248 : vector<1x16xf32> to vector<16x16xf32>
    %250 = arith.addf %247, %249 : vector<16x16xf32>
    %251 = vector.broadcast %3 : vector<16x1xf32> to vector<16x16xf32>
    %252 = arith.mulf %250, %251 : vector<16x16xf32>
    %c0_120 = arith.constant 0 : index
    %c0_121 = arith.constant 0 : index
    %c0_122 = arith.constant 0 : index
    %253 = vector.load %arg11[%c0_120, %c0_121, %c0_122] : memref<1x16x16xf32, #tpu.memory_space<vmem>>, vector<1x16x16xf32>
    %254 = vector.shape_cast %253 : vector<1x16x16xf32> to vector<16x16xf32>
    %255 = vector.shape_cast %252 : vector<16x16xf32> to vector<1x16x16xf32>
    tpu.vector_store %arg11[%c0_120, %c0_121, %c0_122], %255 {strides = array<i32>} : memref<1x16x16xf32, #tpu.memory_space<vmem>>, vector<1x16x16xf32>,
    return
  }
  func.func @transform_0(%arg0: i32) -> (i32, i32, i32) {
    %c0_i32 = arith.constant 0 : i32
    %c0_i32_0 = arith.constant 0 : i32
    %c0_i32_1 = arith.constant 0 : i32
    return %arg0, %c0_i32, %c0_i32_0 : i32, i32, i32
  }
  func.func @transform_1(%arg0: i32) -> (i32, i32, i32) {
    %c0_i32 = arith.constant 0 : i32
    %c0_i32_0 = arith.constant 0 : i32
    %c0_i32_1 = arith.constant 0 : i32
    return %arg0, %c0_i32, %c0_i32_0 : i32, i32, i32
  }
  func.func @transform_2(%arg0: i32) -> (i32, i32, i32) {
    %c0_i32 = arith.constant 0 : i32
    %c0_i32_0 = arith.constant 0 : i32
    %c0_i32_1 = arith.constant 0 : i32
    return %arg0, %c0_i32, %c0_i32_0 : i32, i32, i32
  }
  func.func @transform_3(%arg0: i32) -> (i32, i32, i32) {
    %c0_i32 = arith.constant 0 : i32
    %c0_i32_0 = arith.constant 0 : i32
    %c0_i32_1 = arith.constant 0 : i32
    %c0_i32_2 = arith.constant 0 : i32
    return %c0_i32, %c0_i32_0, %c0_i32_1 : i32, i32, i32
  }
  func.func @transform_4(%arg0: i32) -> (i32, i32, i32) {
    %c0_i32 = arith.constant 0 : i32
    %c0_i32_0 = arith.constant 0 : i32
    %c0_i32_1 = arith.constant 0 : i32
    %c0_i32_2 = arith.constant 0 : i32
    return %c0_i32, %c0_i32_0, %c0_i32_1 : i32, i32, i32
  }
  func.func @transform_5(%arg0: i32) -> (i32, i32, i32) {
    %c0_i32 = arith.constant 0 : i32
    %c0_i32_0 = arith.constant 0 : i32
    %c0_i32_1 = arith.constant 0 : i32
    %c0_i32_2 = arith.constant 0 : i32
    return %c0_i32, %c0_i32_0, %c0_i32_1 : i32, i32, i32
  }
  func.func @transform_6(%arg0: i32) -> (i32, i32, i32) {
    %c0_i32 = arith.constant 0 : i32
    %c0_i32_0 = arith.constant 0 : i32
    %c0_i32_1 = arith.constant 0 : i32
    %c0_i32_2 = arith.constant 0 : i32
    return %c0_i32, %c0_i32_0, %c0_i32_1 : i32, i32, i32
  }
  func.func @transform_7(%arg0: i32) -> (i32, i32, i32) {
    %c0_i32 = arith.constant 0 : i32
    %c0_i32_0 = arith.constant 0 : i32
    %c0_i32_1 = arith.constant 0 : i32
    %c0_i32_2 = arith.constant 0 : i32
    return %c0_i32, %c0_i32_0, %c0_i32_1 : i32, i32, i32
  }
  func.func @transform_8(%arg0: i32) -> (i32, i32) {
    %c0_i32 = arith.constant 0 : i32
    %c0_i32_0 = arith.constant 0 : i32
    %c0_i32_1 = arith.constant 0 : i32
    return %c0_i32, %c0_i32_0 : i32, i32
  }
  func.func @transform_9(%arg0: i32) -> (i32, i32) {
    %c0_i32 = arith.constant 0 : i32
    %c0_i32_0 = arith.constant 0 : i32
    %c0_i32_1 = arith.constant 0 : i32
    return %c0_i32, %c0_i32_0 : i32, i32
  }
  func.func @transform_10(%arg0: i32) -> (i32, i32, i32) {
    %c0_i32 = arith.constant 0 : i32
    %c0_i32_0 = arith.constant 0 : i32
    %c0_i32_1 = arith.constant 0 : i32
    return %arg0, %c0_i32, %c0_i32_0 : i32, i32, i32
  }
}

</mosaic_0001>

<llo_original>
// kernel: tpu_custom_call.1
$region0: #{tpu_custom_call.1}
  #allocation0 [shape = 'u32[]', space=smem, size = 0x4, offset = 0x4, fixed_abs, tag = 'smem constant byte address 0x4 - core index']
  #allocation1 [shape = 'u32[72,128]{1,0:T(1,128)}', space=vmem, size = 0x9000, scoped, tag = 'internal scratch']
  #allocation2 [shape = 'f32[18,16]{1,0:T(8,128)}', space=vmem, size = 0x3000, scoped, tag = 'scratch operand']
  #allocation3 [shape = 'f32[16,16]{1,0:T(8,128)}', space=vmem, size = 0x2000, scoped, tag = 'scratch operand']
  %s0 = inlined_call_operand.vmem [shape: f32[2,16,16], index: 0, kind: input, shape index: {}]
  %s1 = inlined_call_operand.vmem [shape: f32[2,16,1], index: 1, kind: input, shape index: {}]
  %s2 = inlined_call_operand.hbm [shape: f32[2,1,16], index: 2, kind: input, shape index: {}]
  %s3 = inlined_call_operand.hbm [shape: f32[3,3,16], index: 3, kind: input, shape index: {}]
  %s4 = inlined_call_operand.vmem [shape: f32[3,1,16], index: 4, kind: input, shape index: {}]
  %s5 = inlined_call_operand.vmem [shape: f32[3,1,16], index: 5, kind: input, shape index: {}]
  %s6 = inlined_call_operand.hbm [shape: f32[3,16,16], index: 6, kind: input, shape index: {}]
  %s7 = inlined_call_operand.hbm [shape: f32[3,1,16], index: 7, kind: input, shape index: {}]
  %s8 = inlined_call_operand.hbm [shape: f32[16,16], index: 8, kind: input, shape index: {}]
  %s9 = inlined_call_operand.vmem [shape: f32[1,16], index: 9, kind: input, shape index: {}]
  %s10 = inlined_call_operand.hbm [shape: f32[2,16,16], index: 10, kind: output, shape index: {}]
  %s11 = sld [smem:[#allocation0]]
  $region93: #{tpu_custom_call.1} parent=0
    _
  %s13 = ssub.s32 1, %s11
  %s14 = scalar_select 0, %s13, %s11
  $region1: #{tpu_custom_call.1} parent=0
    #allocation4 [shape = 'u8[1024]{0}', space=vmem, size = 0x400, scoped, tag = 'input window, operand 2']
    #allocation5 [shape = 's32[2]{0}', space=sflag, size = 0x8, scoped, tag = 'scoped memory for tpu_custom_call.1']
    #allocation6 [shape = 's32[2]{0}', space=sflag, size = 0x8, scoped, tag = 'scoped memory for tpu_custom_call.1']
    #allocation7 [shape = 'u8[6144]{0}', space=vmem, size = 0x1800, scoped, tag = 'input window, operand 3, single buffered']
    #allocation8 [shape = 's32[1]{0}', space=sflag, size = 0x4, scoped, tag = 'scoped memory for tpu_custom_call.1']
    #allocation9 [shape = 'u8[24576]{0}', space=vmem, size = 0x6000, scoped, tag = 'input window, operand 6, single buffered']
    #allocation10 [shape = 'u8[1536]{0}', space=vmem, size = 0x800, scoped, tag = 'input window, operand 7, single buffered']
    #allocation11 [shape = 's32[1]{0}', space=sflag, size = 0x4, scoped, tag = 'scoped memory for tpu_custom_call.1']
    #allocation12 [shape = 'u8[8192]{0}', space=vmem, size = 0x2000, scoped, tag = 'input window, operand 8, single buffered']
    #allocation13 [shape = 'u8[16384]{0}', space=vmem, size = 0x4000, scoped, tag = 'output window, operand 0']
    %15 = vsyncpa [#allocation5], 0
    %s16 = scalar_lea.sflag [#allocation5], 1
    %17 = vsyncpa %s16, 0
    %18 = vsyncpa [#allocation8], 0
    %19 = vsyncpa [#allocation11], 0
    %20 = vsyncpa [#allocation6], 0
    %s21 = scalar_lea.sflag [#allocation6], 1
    %22 = vsyncpa %s21, 0
    loop: start=0, step=1, limit=4
    $region2: #{tpu_custom_call.1} parent=1 // loop_pre_header
      _
    $region3: #{tpu_custom_call.1} parent=1 // loop_header
      %s24 = sphi 0, %s28
      %p25 = scmp.ge.s32.totalorder %s24, 4
      %s34 = sphi 0, %s36
      %s37 = sphi 0, %s34
      %s38 = sphi 0, %s37
      %s54 = sphi 0, %s38
      %s60 = sphi 0, %s62
      %s63 = sphi 0, %s60
      %s64 = sphi 0, %s63
      %s80 = sphi 0, %s64
      %s86 = sphi 0, %s88
      %s89 = sphi 0, %s86
      %s90 = sphi 0, %s89
      %s106 = sphi 0, %s90
      %s110 = sphi 0, %s110
      %s112 = sphi 0, %s110
      %s113 = sphi 0, %s112
      %s127 = sphi 0, %s113
      %s131 = sphi 0, %s131
      %s133 = sphi 0, %s131
      %s134 = sphi 0, %s133
      %s148 = sphi 0, %s134
      %s152 = sphi 0, %s152
      %s154 = sphi 0, %s152
      %s155 = sphi 0, %s154
      %s169 = sphi 0, %s155
      %s173 = sphi 0, %s173
      %s175 = sphi 0, %s173
      %s176 = sphi 0, %s175
      %s190 = sphi 0, %s176
      %s194 = sphi 0, %s194
      %s196 = sphi 0, %s194
      %s197 = sphi 0, %s196
      %s211 = sphi 0, %s197
      %s215 = sphi 0, %s215
      %s217 = sphi 0, %s215
      %s218 = sphi 0, %s217
      %s232 = sphi 0, %s218
      %s236 = sphi 0, %s236
      %s238 = sphi 0, %s236
      %s239 = sphi 0, %s238
      %s253 = sphi 0, %s239
      %s259 = sphi 0, %s261
      %s262 = sphi 0, %s259
      %s263 = sphi 0, %s262
      %s279 = sphi 0, %s263
    $region4: #{tpu_custom_call.1} parent=1 // loop_header_branch
      %27 = sbr.rel (%p25) target = $region8
    $region5: #{tpu_custom_call.1} parent=1 // loop_body
      %s29 = ssub.s32 %s24, 1
      %s30 = ssub.s32 %s24, 2
      %s31 = sadd.s32 %s24, 1
      %s32 = ssub.s32 %s24, %s31
      %p33 = scmp.eq.s32.totalorder %s32, 0
      %s35 = sadd.s32 %s34, 1
      %s36 = scalar_select %p33, %s34, %s35
      %p39 = pneg %p33
      %p40 = scmp.eq.s32.totalorder %s24, 1
      %p41 = por %p39, %p40
      %p42 = scmp.ne.s32.totalorder %s34, %s37
      %p43 = scmp.eq.s32.totalorder %s24, 0
      %p44 = por %p42, %p43
      %p45 = scmp.ne.s32.totalorder %s34, %s37
      %p46 = scmp.eq.s32.totalorder %s29, 1
      %p47 = por %p45, %p46
      %p48 = scmp.ne.s32.totalorder %s37, %s38
      %p49 = scmp.eq.s32.totalorder %s29, 0
      %p50 = por %p48, %p49
      %p51 = scmp.ne.s32.totalorder %s37, %s38
      %p52 = scmp.eq.s32.totalorder %s30, 1
      %p53 = por %p51, %p52
      %p55 = scmp.ne.s32.totalorder %s38, %s54
      %p56 = scmp.eq.s32.totalorder %s30, 0
      %p57 = por %p55, %p56
      %s58 = ssub.s32 %s24, %s31
      %p59 = scmp.eq.s32.totalorder %s58, 0
      %s61 = sadd.s32 %s60, 1
      %s62 = scalar_select %p59, %s60, %s61
      %p65 = pneg %p59
      %p66 = scmp.eq.s32.totalorder %s24, 1
      %p67 = por %p65, %p66
      %p68 = scmp.ne.s32.totalorder %s60, %s63
      %p69 = scmp.eq.s32.totalorder %s24, 0
      %p70 = por %p68, %p69
      %p71 = scmp.ne.s32.totalorder %s60, %s63
      %p72 = scmp.eq.s32.totalorder %s29, 1
      %p73 = por %p71, %p72
      %p74 = scmp.ne.s32.totalorder %s63, %s64
      %p75 = scmp.eq.s32.totalorder %s29, 0
      %p76 = por %p74, %p75
      %p77 = scmp.ne.s32.totalorder %s63, %s64
      %p78 = scmp.eq.s32.totalorder %s30, 1
      %p79 = por %p77, %p78
      %p81 = scmp.ne.s32.totalorder %s64, %s80
      %p82 = scmp.eq.s32.totalorder %s30, 0
      %p83 = por %p81, %p82
      %s84 = ssub.s32 %s24, %s31
      %p85 = scmp.eq.s32.totalorder %s84, 0
      %s87 = sadd.s32 %s86, 1
      %s88 = scalar_select %p85, %s86, %s87
      %p91 = pneg %p85
      %p92 = scmp.eq.s32.totalorder %s24, 1
      %p93 = por %p91, %p92
      %p94 = scmp.ne.s32.totalorder %s86, %s89
      %p95 = scmp.eq.s32.totalorder %s24, 0
      %p96 = por %p94, %p95
      %p97 = scmp.ne.s32.totalorder %s86, %s89
      %p98 = scmp.eq.s32.totalorder %s29, 1
      %p99 = por %p97, %p98
      %p100 = scmp.ne.s32.totalorder %s89, %s90
      %p101 = scmp.eq.s32.totalorder %s29, 0
      %p102 = por %p100, %p101
      %p103 = scmp.ne.s32.totalorder %s89, %s90
      %p104 = scmp.eq.s32.totalorder %s30, 1
      %p105 = por %p103, %p104
      %p107 = scmp.ne.s32.totalorder %s90, %s106
      %p108 = scmp.eq.s32.totalorder %s30, 0
      %p109 = por %p107, %p108
      %s111 = sadd.s32 %s110, 1
      %p114 = scmp.eq.s32.totalorder %s24, 1
      %p115 = scmp.ne.s32.totalorder %s110, %s112
      %p116 = scmp.eq.s32.totalorder %s24, 0
      %p117 = por %p115, %p116
      %p118 = scmp.ne.s32.totalorder %s110, %s112
      %p119 = scmp.eq.s32.totalorder %s29, 1
      %p120 = por %p118, %p119
      %p121 = scmp.ne.s32.totalorder %s112, %s113
      %p122 = scmp.eq.s32.totalorder %s29, 0
      %p123 = por %p121, %p122
      %p124 = scmp.ne.s32.totalorder %s112, %s113
      %p125 = scmp.eq.s32.totalorder %s30, 1
      %p126 = por %p124, %p125
      %p128 = scmp.ne.s32.totalorder %s113, %s127
      %p129 = scmp.eq.s32.totalorder %s30, 0
      %p130 = por %p128, %p129
      %s132 = sadd.s32 %s131, 1
      %p135 = scmp.eq.s32.totalorder %s24, 1
      %p136 = scmp.ne.s32.totalorder %s131, %s133
      %p137 = scmp.eq.s32.totalorder %s24, 0
      %p138 = por %p136, %p137
      %p139 = scmp.ne.s32.totalorder %s131, %s133
      %p140 = scmp.eq.s32.totalorder %s29, 1
      %p141 = por %p139, %p140
      %p142 = scmp.ne.s32.totalorder %s133, %s134
      %p143 = scmp.eq.s32.totalorder %s29, 0
      %p144 = por %p142, %p143
      %p145 = scmp.ne.s32.totalorder %s133, %s134
      %p146 = scmp.eq.s32.totalorder %s30, 1
      %p147 = por %p145, %p146
      %p149 = scmp.ne.s32.totalorder %s134, %s148
      %p150 = scmp.eq.s32.totalorder %s30, 0
      %p151 = por %p149, %p150
      %s153 = sadd.s32 %s152, 1
      %p156 = scmp.eq.s32.totalorder %s24, 1
      %p157 = scmp.ne.s32.totalorder %s152, %s154
      %p158 = scmp.eq.s32.totalorder %s24, 0
      %p159 = por %p157, %p158
      %p160 = scmp.ne.s32.totalorder %s152, %s154
      %p161 = scmp.eq.s32.totalorder %s29, 1
      %p162 = por %p160, %p161
      %p163 = scmp.ne.s32.totalorder %s154, %s155
      %p164 = scmp.eq.s32.totalorder %s29, 0
      %p165 = por %p163, %p164
      %p166 = scmp.ne.s32.totalorder %s154, %s155
      %p167 = scmp.eq.s32.totalorder %s30, 1
      %p168 = por %p166, %p167
      %p170 = scmp.ne.s32.totalorder %s155, %s169
      %p171 = scmp.eq.s32.totalorder %s30, 0
      %p172 = por %p170, %p171
      %s174 = sadd.s32 %s173, 1
      %p177 = scmp.eq.s32.totalorder %s24, 1
      %p178 = scmp.ne.s32.totalorder %s173, %s175
      %p179 = scmp.eq.s32.totalorder %s24, 0
      %p180 = por %p178, %p179
      %p181 = scmp.ne.s32.totalorder %s173, %s175
      %p182 = scmp.eq.s32.totalorder %s29, 1
      %p183 = por %p181, %p182
      %p184 = scmp.ne.s32.totalorder %s175, %s176
      %p185 = scmp.eq.s32.totalorder %s29, 0
      %p186 = por %p184, %p185
      %p187 = scmp.ne.s32.totalorder %s175, %s176
      %p188 = scmp.eq.s32.totalorder %s30, 1
      %p189 = por %p187, %p188
      %p191 = scmp.ne.s32.totalorder %s176, %s190
      %p192 = scmp.eq.s32.totalorder %s30, 0
      %p193 = por %p191, %p192
      %s195 = sadd.s32 %s194, 1
      %p198 = scmp.eq.s32.totalorder %s24, 1
      %p199 = scmp.ne.s32.totalorder %s194, %s196
      %p200 = scmp.eq.s32.totalorder %s24, 0
      %p201 = por %p199, %p200
      %p202 = scmp.ne.s32.totalorder %s194, %s196
      %p203 = scmp.eq.s32.totalorder %s29, 1
      %p204 = por %p202, %p203
      %p205 = scmp.ne.s32.totalorder %s196, %s197
      %p206 = scmp.eq.s32.totalorder %s29, 0
      %p207 = por %p205, %p206
      %p208 = scmp.ne.s32.totalorder %s196, %s197
      %p209 = scmp.eq.s32.totalorder %s30, 1
      %p210 = por %p208, %p209
      %p212 = scmp.ne.s32.totalorder %s197, %s211
      %p213 = scmp.eq.s32.totalorder %s30, 0
      %p214 = por %p212, %p213
      %s216 = sadd.s32 %s215, 1
      %p219 = scmp.eq.s32.totalorder %s24, 1
      %p220 = scmp.ne.s32.totalorder %s215, %s217
      %p221 = scmp.eq.s32.totalorder %s24, 0
      %p222 = por %p220, %p221
      %p223 = scmp.ne.s32.totalorder %s215, %s217
      %p224 = scmp.eq.s32.totalorder %s29, 1
      %p225 = por %p223, %p224
      %p226 = scmp.ne.s32.totalorder %s217, %s218
      %p227 = scmp.eq.s32.totalorder %s29, 0
      %p228 = por %p226, %p227
      %p229 = scmp.ne.s32.totalorder %s217, %s218
      %p230 = scmp.eq.s32.totalorder %s30, 1
      %p231 = por %p229, %p230
      %p233 = scmp.ne.s32.totalorder %s218, %s232
      %p234 = scmp.eq.s32.totalorder %s30, 0
      %p235 = por %p233, %p234
      %s237 = sadd.s32 %s236, 1
      %p240 = scmp.eq.s32.totalorder %s24, 1
      %p241 = scmp.ne.s32.totalorder %s236, %s238
      %p242 = scmp.eq.s32.totalorder %s24, 0
      %p243 = por %p241, %p242
      %p244 = scmp.ne.s32.totalorder %s236, %s238
      %p245 = scmp.eq.s32.totalorder %s29, 1
      %p246 = por %p244, %p245
      %p247 = scmp.ne.s32.totalorder %s238, %s239
      %p248 = scmp.eq.s32.totalorder %s29, 0
      %p249 = por %p247, %p248
      %p250 = scmp.ne.s32.totalorder %s238, %s239
      %p251 = scmp.eq.s32.totalorder %s30, 1
      %p252 = por %p250, %p251
      %p254 = scmp.ne.s32.totalorder %s239, %s253
      %p255 = scmp.eq.s32.totalorder %s30, 0
      %p256 = por %p254, %p255
      %s257 = ssub.s32 %s24, %s31
      %p258 = scmp.eq.s32.totalorder %s257, 0
      %s260 = sadd.s32 %s259, 1
      %s261 = scalar_select %p258, %s259, %s260
      %p264 = pneg %p258
      %p265 = scmp.eq.s32.totalorder %s24, 1
      %p266 = por %p264, %p265
      %p267 = scmp.ne.s32.totalorder %s259, %s262
      %p268 = scmp.eq.s32.totalorder %s24, 0
      %p269 = por %p267, %p268
      %p270 = scmp.ne.s32.totalorder %s259, %s262
      %p271 = scmp.eq.s32.totalorder %s29, 1
      %p272 = por %p270, %p271
      %p273 = scmp.ne.s32.totalorder %s262, %s263
      %p274 = scmp.eq.s32.totalorder %s29, 0
      %p275 = por %p273, %p274
      %p276 = scmp.ne.s32.totalorder %s262, %s263
      %p277 = scmp.eq.s32.totalorder %s30, 1
      %p278 = por %p276, %p277
      %p280 = scmp.ne.s32.totalorder %s263, %s279
      %p281 = scmp.eq.s32.totalorder %s30, 0
      %p282 = por %p280, %p281
      %p283 = scmp.le.s32.totalorder 1, %s24
      %p284 = scmp.lt.s32.totalorder %s24, 3
      %p285 = pnand %p283, %p284
      %p286 = pneg %p285
      // Predicated region
      $region9: #{tpu_custom_call.1} parent=5 // pred_check
        _
      $region10: #{tpu_custom_call.1} parent=5 // pred_check_branch
        %288 = sbr.rel (%p285) target = $region12
      $region11: #{tpu_custom_call.1} parent=5 // pred_region
        %s289 = ssub.s32 %s24, 1
        // Predicated region
        $region13: #{tpu_custom_call.1} parent=11 // pred_check
          %p290 = pneg %p123
        $region14: #{tpu_custom_call.1} parent=11 // pred_check_branch
          %292 = sbr.rel (%p290) target = $region16
        $region15: #{tpu_custom_call.1} parent=11 // pred_region
          %294 = vsyncadd [#allocation8], 0
          %s295 = sshll.u32 %s3, 4
          %s296 = int_to_ptr.hbm [resolvable:$true] %s295
          %s297 = sshll.u32 [#allocation7], 4
          %s298 = int_to_ptr.vmem [resolvable:$true] %s297
          %303 = dma.hbm_to_vmem [thread:$0]  %s296, 192, %s298, [#allocation8], 64, 64, 4
        $region16: #{tpu_custom_call.1} parent=11 // pred_fallthru
          _
        // Predicated region
        $region17: #{tpu_custom_call.1} parent=11 // pred_check
          %p304 = pneg %p144
        $region18: #{tpu_custom_call.1} parent=11 // pred_check_branch
          %306 = sbr.rel (%p304) target = $region20
        $region19: #{tpu_custom_call.1} parent=11 // pred_region
          _
        $region20: #{tpu_custom_call.1} parent=11 // pred_fallthru
          _
        // Predicated region
        $region21: #{tpu_custom_call.1} parent=11 // pred_check
          %p307 = pneg %p165
        $region22: #{tpu_custom_call.1} parent=11 // pred_check_branch
          %309 = sbr.rel (%p307) target = $region24
        $region23: #{tpu_custom_call.1} parent=11 // pred_region
          _
        $region24: #{tpu_custom_call.1} parent=11 // pred_fallthru
          _
        // Predicated region
        $region25: #{tpu_custom_call.1} parent=11 // pred_check
          %p310 = pneg %p186
        $region26: #{tpu_custom_call.1} parent=11 // pred_check_branch
          %312 = sbr.rel (%p310) target = $region28
        $region27: #{tpu_custom_call.1} parent=11 // pred_region
          %314 = vsyncadd [#allocation8], 0
          %s315 = sshll.u32 %s6, 4
          %s316 = int_to_ptr.hbm [resolvable:$true] %s315
          %s317 = sshll.u32 [#allocation9], 4
          %s318 = int_to_ptr.vmem [resolvable:$true] %s317
          %323 = dma.hbm_to_vmem [thread:$0]  %s316, 768, %s318, [#allocation8], 128, 128, 8
        $region28: #{tpu_custom_call.1} parent=11 // pred_fallthru
          _
        // Predicated region
        $region29: #{tpu_custom_call.1} parent=11 // pred_check
          %p324 = pneg %p207
        $region30: #{tpu_custom_call.1} parent=11 // pred_check_branch
          %326 = sbr.rel (%p324) target = $region32
        $region31: #{tpu_custom_call.1} parent=11 // pred_region
          %328 = vsyncadd [#allocation11], 0
          %s329 = sshll.u32 %s7, 4
          %s330 = int_to_ptr.hbm [resolvable:$true] %s329
          %s331 = sshll.u32 [#allocation10], 4
          %s332 = int_to_ptr.vmem [resolvable:$true] %s331
          %337 = dma.hbm_to_vmem [thread:$0]  %s330, 48, %s332, [#allocation11], 16, 16, 1
        $region32: #{tpu_custom_call.1} parent=11 // pred_fallthru
          _
        // Predicated region
        $region33: #{tpu_custom_call.1} parent=11 // pred_check
          %p338 = pneg %p228
        $region34: #{tpu_custom_call.1} parent=11 // pred_check_branch
          %340 = sbr.rel (%p338) target = $region36
        $region35: #{tpu_custom_call.1} parent=11 // pred_region
          %342 = vsyncadd [#allocation11], 0
          %s343 = sshll.u32 %s8, 4
          %s344 = int_to_ptr.hbm [resolvable:$true] %s343
          %s345 = sshll.u32 [#allocation12], 4
          %s346 = int_to_ptr.vmem [resolvable:$true] %s345
          %351 = dma.hbm_to_vmem [thread:$0]  %s344, 256, %s346, [#allocation11], 128, 128, 8
        $region36: #{tpu_custom_call.1} parent=11 // pred_fallthru
          _
        // Predicated region
        $region37: #{tpu_custom_call.1} parent=11 // pred_check
          %p352 = pneg %p249
        $region38: #{tpu_custom_call.1} parent=11 // pred_check_branch
          %354 = sbr.rel (%p352) target = $region40
        $region39: #{tpu_custom_call.1} parent=11 // pred_region
          _
        $region40: #{tpu_custom_call.1} parent=11 // pred_fallthru
          _
      $region12: #{tpu_custom_call.1} parent=5 // pred_fallthru
        _
      %p355 = scmp.lt.s32.totalorder %s24, 2
      // Predicated region
      $region41: #{tpu_custom_call.1} parent=5 // pred_check
        %p356 = pneg %p355
      $region42: #{tpu_custom_call.1} parent=5 // pred_check_branch
        %358 = sbr.rel (%p356) target = $region44
      $region43: #{tpu_custom_call.1} parent=5 // pred_region
        // Predicated region
        $region45: #{tpu_custom_call.1} parent=43 // pred_check
          %p359 = pneg %p44
        $region46: #{tpu_custom_call.1} parent=43 // pred_check_branch
          %361 = sbr.rel (%p359) target = $region48
        $region47: #{tpu_custom_call.1} parent=43 // pred_region
          %p362 = scmp.lt.s32.totalorder %s24, 1
          %s363 = scalar_select %p362, %s24, 1
          %s364 = smul.addr %s363, 2
          %s365 = smul.addr %s364, 8
          %s366 = scalar_lea.vmem %s0, %s365
        $region48: #{tpu_custom_call.1} parent=43 // pred_fallthru
          _
        // Predicated region
        $region49: #{tpu_custom_call.1} parent=43 // pred_check
          %p367 = pneg %p70
        $region50: #{tpu_custom_call.1} parent=43 // pred_check_branch
          %369 = sbr.rel (%p367) target = $region52
        $region51: #{tpu_custom_call.1} parent=43 // pred_region
          %p370 = scmp.lt.s32.totalorder %s24, 1
          %s371 = scalar_select %p370, %s24, 1
          %s372 = smul.addr %s371, 2
          %s373 = smul.addr %s372, 8
          %s374 = scalar_lea.vmem %s1, %s373
        $region52: #{tpu_custom_call.1} parent=43 // pred_fallthru
          _
        // Predicated region
        $region53: #{tpu_custom_call.1} parent=43 // pred_check
          %p375 = pneg %p96
        $region54: #{tpu_custom_call.1} parent=43 // pred_check_branch
          %377 = sbr.rel (%p375) target = $region56
        $region55: #{tpu_custom_call.1} parent=43 // pred_region
          %s378 = sand.u32 %s86, 1
          %s379 = scalar_lea.sflag [#allocation5], %s378
          %s380 = sand.u32 %s86, 1
          %s381 = scalar_lea.vmem [#allocation4], %s380
          %383 = vsyncadd %s379, 0
          %s384 = scalar_lea.hbm %s2, %s24
          %s386 = sshll.u32 %s384, 4
          %s387 = int_to_ptr.hbm [resolvable:$true] %s386
          %s388 = sshll.u32 %s381, 4
          %s389 = int_to_ptr.vmem [resolvable:$true] %s388
          %391 = dma.hbm_to_vmem [thread:$0]  %s387, 16, %s389, %s379
        $region56: #{tpu_custom_call.1} parent=43 // pred_fallthru
          _
      $region44: #{tpu_custom_call.1} parent=5 // pred_fallthru
        _
      %p392 = scmp.le.s32.totalorder 1, %s24
      %p393 = scmp.lt.s32.totalorder %s24, 3
      %p394 = pnand %p392, %p393
      %p395 = pneg %p394
      // Predicated region
      $region57: #{tpu_custom_call.1} parent=5 // pred_check
        _
      $region58: #{tpu_custom_call.1} parent=5 // pred_check_branch
        %397 = sbr.rel (%p394) target = $region60
      $region59: #{tpu_custom_call.1} parent=5 // pred_region
        %s398 = ssub.s32 %s24, 1
        %s399 = sand.u32 %s89, 1
        %s400 = scalar_lea.sflag [#allocation5], %s399
        %s401 = sand.u32 %s89, 1
        %s402 = scalar_lea.vmem [#allocation4], %s401
        // Predicated region
        $region61: #{tpu_custom_call.1} parent=59 // pred_check
          %p403 = pneg %p102
        $region62: #{tpu_custom_call.1} parent=59 // pred_check_branch
          %405 = sbr.rel (%p403) target = $region64
        $region63: #{tpu_custom_call.1} parent=59 // pred_region
          %407 = dma.done %s400, 16
        $region64: #{tpu_custom_call.1} parent=59 // pred_fallthru
          _
        // Predicated region
        $region65: #{tpu_custom_call.1} parent=59 // pred_check
          %p408 = pneg %p123
        $region66: #{tpu_custom_call.1} parent=59 // pred_check_branch
          %410 = sbr.rel (%p408) target = $region68
        $region67: #{tpu_custom_call.1} parent=59 // pred_region
          %412 = dma.done [#allocation8], 192
        $region68: #{tpu_custom_call.1} parent=59 // pred_fallthru
          _
        // Predicated region
        $region69: #{tpu_custom_call.1} parent=59 // pred_check
          %p413 = pneg %p186
        $region70: #{tpu_custom_call.1} parent=59 // pred_check_branch
          %415 = sbr.rel (%p413) target = $region72
        $region71: #{tpu_custom_call.1} parent=59 // pred_region
          %417 = dma.done [#allocation8], 768
        $region72: #{tpu_custom_call.1} parent=59 // pred_fallthru
          _
        // Predicated region
        $region73: #{tpu_custom_call.1} parent=59 // pred_check
          %p418 = pneg %p207
        $region74: #{tpu_custom_call.1} parent=59 // pred_check_branch
          %420 = sbr.rel (%p418) target = $region76
        $region75: #{tpu_custom_call.1} parent=59 // pred_region
          %422 = dma.done [#allocation11], 48
        $region76: #{tpu_custom_call.1} parent=59 // pred_fallthru
          _
        // Predicated region
        $region77: #{tpu_custom_call.1} parent=59 // pred_check
          %p423 = pneg %p228
        $region78: #{tpu_custom_call.1} parent=59 // pred_check_branch
          %425 = sbr.rel (%p423) target = $region80
        $region79: #{tpu_custom_call.1} parent=59 // pred_region
          %427 = dma.done [#allocation11], 256
        $region80: #{tpu_custom_call.1} parent=59 // pred_fallthru
          _
        %p428 = scmp.lt.s32.totalorder %s29, 1
        %s429 = scalar_select %p428, %s29, 1
        %s430 = smul.addr %s429, 2
        %s431 = smul.addr %s430, 8
        %s432 = scalar_lea.vmem %s0, %s431
        %p433 = pneg %p50
        %p434 = pneg %p47
        %p435 = scmp.lt.s32.totalorder %s29, 1
        %s436 = scalar_select %p435, %s29, 1
        %s437 = smul.addr %s436, 2
        %s438 = smul.addr %s437, 8
        %s439 = scalar_lea.vmem %s1, %s438
        %p440 = pneg %p76
        %p441 = pneg %p73
        %s442 = sand.u32 %s89, 1
        %s443 = scalar_lea.sflag [#allocation5], %s442
        %s444 = sand.u32 %s89, 1
        %s445 = scalar_lea.vmem [#allocation4], %s444
        %p446 = pneg %p102
        %p447 = pneg %p99
        %p448 = pneg %p123
        %p449 = pneg %p120
        %p450 = pneg %p144
        %p451 = pneg %p141
        %p452 = pneg %p165
        %p453 = pneg %p162
        %p454 = pneg %p186
        %p455 = pneg %p183
        %p456 = pneg %p207
        %p457 = pneg %p204
        %p458 = pneg %p228
        %p459 = pneg %p225
        %p460 = pneg %p249
        %p461 = pneg %p246
        %p462 = pneg %p275
        %p463 = pneg %p272
        %s464 = sand.u32 %s262, 1
        %s465 = scalar_lea.sflag [#allocation6], %s464
        %s466 = sand.u32 %s262, 1
        %s467 = smul.addr %s466, 16
        %s468 = scalar_lea.vmem [#allocation13], %s467
        %p469 = scmp.lt.s32.totalorder %s29, 1
        %s470 = scalar_select %p469, %s29, 1
        %s471 = smul.addr %s470, 2
        %s472 = smul.addr %s471, 8
        %s473 = scalar_lea.vmem %s0, %s472
        %p474 = scmp.lt.s32.totalorder %s29, 1
        %s475 = scalar_select %p474, %s29, 1
        %s476 = smul.addr %s475, 2
        %s477 = smul.addr %s476, 8
        %s478 = scalar_lea.vmem %s1, %s477
        %v479 = vld [vmem:[%s473] sm:$0xff]
        %v480 = vld [vmem:[%s473 + $0x8] sm:$0xff]
        %v481 = vld [vmem:[%s478] sm:$0xff]
        %v482 = vld [vmem:[%s478 + $0x8] sm:$0xff]
        %v483 = vld [vmem:[%s402] sm:$0x1]
        %vm484 = vcmask 122880
        %485 = vst.msk [vmem:[#allocation2] sm:$0x1] %vm484, 0.0
        %486 = vst.msk [vmem:[#allocation2 + $0x11] sm:$0x1] %vm484, 0.0
        %vm487 = vcmask 130048
        %488 = vst.msk [vmem:[#allocation2 + $0x1] sm:$0xff] %vm487, %v479
        %489 = vst.msk [vmem:[#allocation2 + $0x9] sm:$0xff] %vm487, %v480
        %v490 = vld [vmem:[#allocation2] sm:$0xff]
        %v491 = vld [vmem:[#allocation2 + $0x8] sm:$0xff]
        %v492 = vld [vmem:[#allocation2 + $0x1] sm:$0xff]
        %v493 = vld [vmem:[#allocation2 + $0x9] sm:$0xff]
        %v494 = vld [vmem:[#allocation2 + $0x2] sm:$0xff]
        %v495 = vld [vmem:[#allocation2 + $0xa] sm:$0xff]
        %v496 = vld [vmem:[#allocation7] sm:$0x7]
        %v497 = vperm.slane %v496, 0
        %v498 = vmul.f32 %v490, %v497
        %v499 = vmul.f32 %v491, %v497
        %v500 = vperm.slane %v496, 1
        %v501 = vmul.f32 %v492, %v500
        %v502 = vmul.f32 %v493, %v500
        %v503 = vadd.f32 %v498, %v501
        %v504 = vadd.f32 %v499, %v502
        %v505 = vperm.slane %v496, 2
        %v506 = vmul.f32 %v494, %v505
        %v507 = vmul.f32 %v495, %v505
        %v508 = vadd.f32 %v503, %v506
        %v509 = vadd.f32 %v504, %v507
        %511 = vset.pattern.permute.xlu0 0
        %512 = vperm.xlu0 %511, %v481
        %v513 = vpop.permute.xlu0 %512
        %516 = vset.pattern.permute.xlu0 0
        %517 = vperm.xlu0 %516, %v482
        %v518 = vpop.permute.xlu0 %517
        %v520 = vmul.f32 %v508, %v513
        %v521 = vmul.f32 %v509, %v518
        %v522 = vsel %vm487, %v520, 0.0
        %523 = vadd.xlane.f32.xlu0 %v522
        %v524 = vpop.xlane.xlu0 %523
        %v525 = vsel %vm487, %v521, 0.0
        %526 = vadd.xlane.f32.xlu0 %v525
        %v527 = vpop.xlane.xlu0 %526
        %v528 = vrcp.pop 16.0
        %v529 = vmul.f32 16.0, %v528
        %v530 = vsub.f32 1.0, %v529
        %v531 = vmul.f32 %v528, %v530
        %v532 = vadd.f32 %v528, %v531
        %vm533 = vweird.f32 %v528
        %v534 = vsel %vm533, %v528, %v532
        %v535 = vmul.f32 %v524, %v534
        %v536 = vmul.f32 %v527, %v534
        %v537 = vsub.f32 %v520, %v535
        %v538 = vsub.f32 %v521, %v536
        %v539 = vmul.f32 %v537, %v537
        %v540 = vmul.f32 %v538, %v538
        %v541 = vsel %vm487, %v539, 0.0
        %542 = vadd.xlane.f32.xlu0 %v541
        %v543 = vpop.xlane.xlu0 %542
        %v544 = vsel %vm487, %v540, 0.0
        %545 = vadd.xlane.f32.xlu0 %v544
        %v546 = vpop.xlane.xlu0 %545
        %v547 = vmul.f32 %v543, %v534
        %v548 = vmul.f32 %v546, %v534
        %v549 = vadd.f32 %v547, 1e-05
        %v550 = vadd.f32 %v548, 1e-05
        %v551 = vrsqrt.pop %v549
        %v552 = vmul.f32 %v551, %v549
        %v553 = vmul.f32 %v552, %v551
        %v554 = vmul.f32 0.5, %v553
        %v555 = vsub.f32 1.5, %v554
        %v556 = vmul.f32 %v551, %v555
        %v557 = vmul.f32 %v549, %v556
        %vm558 = vcmp.eq.f32.partialorder %v549, inf
        %v559 = vsel %vm558, %v549, %v557
        %vm560 = vcmp.eq.f32.partialorder %v549, 0.0
        %v561 = vand.u32 %v549, 2147483648
        %v562 = vsel %vm560, %v561, %v559
        %v563 = vrsqrt.pop %v550
        %v564 = vmul.f32 %v563, %v550
        %v565 = vmul.f32 %v564, %v563
        %v566 = vmul.f32 0.5, %v565
        %v567 = vsub.f32 1.5, %v566
        %v568 = vmul.f32 %v563, %v567
        %v569 = vmul.f32 %v550, %v568
        %vm570 = vcmp.eq.f32.partialorder %v550, inf
        %v571 = vsel %vm570, %v550, %v569
        %vm572 = vcmp.eq.f32.partialorder %v550, 0.0
        %v573 = vand.u32 %v550, 2147483648
        %v574 = vsel %vm572, %v573, %v571
        %v575 = vrcp.pop %v562
        %v576 = vmul.f32 %v562, %v575
        %v577 = vsub.f32 1.0, %v576
        %v578 = vmul.f32 %v575, %v577
        %v579 = vadd.f32 %v575, %v578
        %vm580 = vweird.f32 %v562
        %vm581 = vweird.f32 %v575
        %vm582 = vmor %vm580, %vm581
        %v583 = vsel %vm582, %v575, %v579
        %v584 = vand.u32 2147483647, %v562
        %vm585 = vcmp.eq.f32.partialorder %v584, 8.507059e+37
        %v586 = vand.u32 %v562, 2147483648
        %v587 = vor.u32 1.1754944e-38, %v586
        %v588 = vsel %vm585, %v587, %v583
        %v589 = vmul.f32 %v537, %v588
        %v590 = vrcp.pop %v574
        %v591 = vmul.f32 %v574, %v590
        %v592 = vsub.f32 1.0, %v591
        %v593 = vmul.f32 %v590, %v592
        %v594 = vadd.f32 %v590, %v593
        %vm595 = vweird.f32 %v574
        %vm596 = vweird.f32 %v590
        %vm597 = vmor %vm595, %vm596
        %v598 = vsel %vm597, %v590, %v594
        %v599 = vand.u32 2147483647, %v574
        %vm600 = vcmp.eq.f32.partialorder %v599, 8.507059e+37
        %v601 = vand.u32 %v574, 2147483648
        %v602 = vor.u32 1.1754944e-38, %v601
        %v603 = vsel %vm600, %v602, %v598
        %v604 = vmul.f32 %v538, %v603
        %v605 = vld [vmem:[%s4] sm:$0x1]
        %v607 = vperm.slane %v605, 0
        %v609 = vmul.f32 %v589, %v607
        %v610 = vmul.f32 %v604, %v607
        %v611 = vld [vmem:[%s5] sm:$0x1]
        %v613 = vperm.slane %v611, 0
        %v615 = vadd.f32 %v609, %v613
        %v616 = vadd.f32 %v610, %v613
        %v617 = vld [vmem:[#allocation9] sm:$0xff]
        %v618 = vld [vmem:[#allocation9 + $0x8] sm:$0xff]
        %v619 = vld [vmem:[#allocation10] sm:$0x1]
        %v621 = vperm.slane %v619, 0
        %v624 = vsel %vm487, %v615, 0
        %v627 = vsel %vm487, %v616, 0
        %629 = vmatpush.msra.mxu0 0.0
        %630 = vmatpush.msra.mxu0 0.0
        %631 = vmatpush.msra.mxu0 0.0
        %632 = vmatpush.msra.mxu0 0.0
        %633 = vmatpush.msra.mxu0 0.0
        %634 = vmatpush.msra.mxu0 0.0
        %635 = vmatpush.msra.mxu0 0.0
        %636 = vmatpush.msra.mxu0 0.0
        %637 = vmatpush.msra.mxu0 0.0
        %638 = vmatpush.msra.mxu0 0.0
        %639 = vmatpush.msra.mxu0 0.0
        %640 = vmatpush.msra.mxu0 0.0
        %641 = vmatpush.msra.mxu0 0.0
        %642 = vmatpush.msra.mxu0 0.0
        %643 = vmatpush.msra.mxu0 %v618
        %644 = vmatpush.msra.mxu0 %v617
        %645 = vmatmul.f32.gmra.mxu0 %v624
        %v646 = vpop.f32.mrf.mxu0
        %v647 = vadd.f32 %v621, %v646
        %648 = vmatmul.f32.gmra.mxu0 %v627
        %v649 = vpop.f32.mrf.mxu0
        %v650 = vadd.f32 %v621, %v649
        %651 = vdwg.mxu0
        %s652 = scalar_lea.vmem [#allocation7], 4
        %v653 = vld [vmem:[%s652] sm:$0x7]
        %v654 = vperm.slane %v653, 0
        %v655 = vmul.f32 %v490, %v654
        %v656 = vmul.f32 %v491, %v654
        %v657 = vperm.slane %v653, 1
        %v658 = vmul.f32 %v492, %v657
        %v659 = vmul.f32 %v493, %v657
        %v660 = vadd.f32 %v655, %v658
        %v661 = vadd.f32 %v656, %v659
        %v662 = vperm.slane %v653, 2
        %v663 = vmul.f32 %v494, %v662
        %v664 = vmul.f32 %v495, %v662
        %v665 = vadd.f32 %v660, %v663
        %v666 = vadd.f32 %v661, %v664
        %v667 = vmul.f32 %v665, %v513
        %v668 = vmul.f32 %v666, %v518
        %v669 = vsel %vm487, %v667, 0.0
        %670 = vadd.xlane.f32.xlu0 %v669
        %v671 = vpop.xlane.xlu0 %670
        %v672 = vsel %vm487, %v668, 0.0
        %673 = vadd.xlane.f32.xlu0 %v672
        %v674 = vpop.xlane.xlu0 %673
        %v675 = vmul.f32 %v671, %v534
        %v676 = vmul.f32 %v674, %v534
        %v677 = vsub.f32 %v667, %v675
        %v678 = vsub.f32 %v668, %v676
        %v679 = vmul.f32 %v677, %v677
        %v680 = vmul.f32 %v678, %v678
        %v681 = vsel %vm487, %v679, 0.0
        %682 = vadd.xlane.f32.xlu0 %v681
        %v683 = vpop.xlane.xlu0 %682
        %v684 = vsel %vm487, %v680, 0.0
        %685 = vadd.xlane.f32.xlu0 %v684
        %v686 = vpop.xlane.xlu0 %685
        %v687 = vmul.f32 %v683, %v534
        %v688 = vmul.f32 %v686, %v534
        %v689 = vadd.f32 %v687, 1e-05
        %v690 = vadd.f32 %v688, 1e-05
        %v691 = vrsqrt.pop %v689
        %v692 = vmul.f32 %v691, %v689
        %v693 = vmul.f32 %v692, %v691
        %v694 = vmul.f32 0.5, %v693
        %v695 = vsub.f32 1.5, %v694
        %v696 = vmul.f32 %v691, %v695
        %v697 = vmul.f32 %v689, %v696
        %vm698 = vcmp.eq.f32.partialorder %v689, inf
        %v699 = vsel %vm698, %v689, %v697
        %vm700 = vcmp.eq.f32.partialorder %v689, 0.0
        %v701 = vand.u32 %v689, 2147483648
        %v702 = vsel %vm700, %v701, %v699
        %v703 = vrsqrt.pop %v690
        %v704 = vmul.f32 %v703, %v690
        %v705 = vmul.f32 %v704, %v703
        %v706 = vmul.f32 0.5, %v705
        %v707 = vsub.f32 1.5, %v706
        %v708 = vmul.f32 %v703, %v707
        %v709 = vmul.f32 %v690, %v708
        %vm710 = vcmp.eq.f32.partialorder %v690, inf
        %v711 = vsel %vm710, %v690, %v709
        %vm712 = vcmp.eq.f32.partialorder %v690, 0.0
        %v713 = vand.u32 %v690, 2147483648
        %v714 = vsel %vm712, %v713, %v711
        %v715 = vrcp.pop %v702
        %v716 = vmul.f32 %v702, %v715
        %v717 = vsub.f32 1.0, %v716
        %v718 = vmul.f32 %v715, %v717
        %v719 = vadd.f32 %v715, %v718
        %vm720 = vweird.f32 %v702
        %vm721 = vweird.f32 %v715
        %vm722 = vmor %vm720, %vm721
        %v723 = vsel %vm722, %v715, %v719
        %v724 = vand.u32 2147483647, %v702
        %vm725 = vcmp.eq.f32.partialorder %v724, 8.507059e+37
        %v726 = vand.u32 %v702, 2147483648
        %v727 = vor.u32 1.1754944e-38, %v726
        %v728 = vsel %vm725, %v727, %v723
        %v729 = vmul.f32 %v677, %v728
        %v730 = vrcp.pop %v714
        %v731 = vmul.f32 %v714, %v730
        %v732 = vsub.f32 1.0, %v731
        %v733 = vmul.f32 %v730, %v732
        %v734 = vadd.f32 %v730, %v733
        %vm735 = vweird.f32 %v714
        %vm736 = vweird.f32 %v730
        %vm737 = vmor %vm735, %vm736
        %v738 = vsel %vm737, %v730, %v734
        %v739 = vand.u32 2147483647, %v714
        %vm740 = vcmp.eq.f32.partialorder %v739, 8.507059e+37
        %v741 = vand.u32 %v714, 2147483648
        %v742 = vor.u32 1.1754944e-38, %v741
        %v743 = vsel %vm740, %v742, %v738
        %v744 = vmul.f32 %v678, %v743
        %s745 = scalar_lea.vmem %s4, 1
        %v746 = vld [vmem:[%s745] sm:$0x1]
        %v748 = vperm.slane %v746, 0
        %v750 = vmul.f32 %v729, %v748
        %v751 = vmul.f32 %v744, %v748
        %s752 = scalar_lea.vmem %s5, 1
        %v753 = vld [vmem:[%s752] sm:$0x1]
        %v755 = vperm.slane %v753, 0
        %v757 = vadd.f32 %v750, %v755
        %v758 = vadd.f32 %v751, %v755
        %s759 = scalar_lea.vmem [#allocation9], 16
        %v760 = vld [vmem:[%s759] sm:$0xff]
        %v761 = vld [vmem:[%s759 + $0x8] sm:$0xff]
        %s762 = scalar_lea.vmem [#allocation10], 1
        %v763 = vld [vmem:[%s762] sm:$0x1]
        %v765 = vperm.slane %v763, 0
        %v768 = vsel %vm487, %v757, 0
        %v771 = vsel %vm487, %v758, 0
        %773 = vmatpush.msra.mxu0 0.0
        %774 = vmatpush.msra.mxu0 0.0
        %775 = vmatpush.msra.mxu0 0.0
        %776 = vmatpush.msra.mxu0 0.0
        %777 = vmatpush.msra.mxu0 0.0
        %778 = vmatpush.msra.mxu0 0.0
        %779 = vmatpush.msra.mxu0 0.0
        %780 = vmatpush.msra.mxu0 0.0
        %781 = vmatpush.msra.mxu0 0.0
        %782 = vmatpush.msra.mxu0 0.0
        %783 = vmatpush.msra.mxu0 0.0
        %784 = vmatpush.msra.mxu0 0.0
        %785 = vmatpush.msra.mxu0 0.0
        %786 = vmatpush.msra.mxu0 0.0
        %787 = vmatpush.msra.mxu0 %v761
        %788 = vmatpush.msra.mxu0 %v760
        %789 = vmatmul.f32.gmra.mxu0 %v768
        %v790 = vpop.f32.mrf.mxu0
        %v791 = vadd.f32 %v765, %v790
        %792 = vmatmul.f32.gmra.mxu0 %v771
        %v793 = vpop.f32.mrf.mxu0
        %v794 = vadd.f32 %v765, %v793
        %795 = vdwg.mxu0
        %s796 = scalar_lea.vmem [#allocation7], 8
        %v797 = vld [vmem:[%s796] sm:$0x7]
        %v798 = vperm.slane %v797, 0
        %v799 = vmul.f32 %v490, %v798
        %v800 = vmul.f32 %v491, %v798
        %v801 = vperm.slane %v797, 1
        %v802 = vmul.f32 %v492, %v801
        %v803 = vmul.f32 %v493, %v801
        %v804 = vadd.f32 %v799, %v802
        %v805 = vadd.f32 %v800, %v803
        %v806 = vperm.slane %v797, 2
        %v807 = vmul.f32 %v494, %v806
        %v808 = vmul.f32 %v495, %v806
        %v809 = vadd.f32 %v804, %v807
        %v810 = vadd.f32 %v805, %v808
        %v811 = vmul.f32 %v809, %v513
        %v812 = vmul.f32 %v810, %v518
        %v813 = vsel %vm487, %v811, 0.0
        %814 = vadd.xlane.f32.xlu0 %v813
        %v815 = vpop.xlane.xlu0 %814
        %v816 = vsel %vm487, %v812, 0.0
        %817 = vadd.xlane.f32.xlu0 %v816
        %v818 = vpop.xlane.xlu0 %817
        %v819 = vmul.f32 %v815, %v534
        %v820 = vmul.f32 %v818, %v534
        %v821 = vsub.f32 %v811, %v819
        %v822 = vsub.f32 %v812, %v820
        %v823 = vmul.f32 %v821, %v821
        %v824 = vmul.f32 %v822, %v822
        %v825 = vsel %vm487, %v823, 0.0
        %826 = vadd.xlane.f32.xlu0 %v825
        %v827 = vpop.xlane.xlu0 %826
        %v828 = vsel %vm487, %v824, 0.0
        %829 = vadd.xlane.f32.xlu0 %v828
        %v830 = vpop.xlane.xlu0 %829
        %v831 = vmul.f32 %v827, %v534
        %v832 = vmul.f32 %v830, %v534
        %v833 = vadd.f32 %v831, 1e-05
        %v834 = vadd.f32 %v832, 1e-05
        %v835 = vrsqrt.pop %v833
        %v836 = vmul.f32 %v835, %v833
        %v837 = vmul.f32 %v836, %v835
        %v838 = vmul.f32 0.5, %v837
        %v839 = vsub.f32 1.5, %v838
        %v840 = vmul.f32 %v835, %v839
        %v841 = vmul.f32 %v833, %v840
        %vm842 = vcmp.eq.f32.partialorder %v833, inf
        %v843 = vsel %vm842, %v833, %v841
        %vm844 = vcmp.eq.f32.partialorder %v833, 0.0
        %v845 = vand.u32 %v833, 2147483648
        %v846 = vsel %vm844, %v845, %v843
        %v847 = vrsqrt.pop %v834
        %v848 = vmul.f32 %v847, %v834
        %v849 = vmul.f32 %v848, %v847
        %v850 = vmul.f32 0.5, %v849
        %v851 = vsub.f32 1.5, %v850
        %v852 = vmul.f32 %v847, %v851
        %v853 = vmul.f32 %v834, %v852
        %vm854 = vcmp.eq.f32.partialorder %v834, inf
        %v855 = vsel %vm854, %v834, %v853
        %vm856 = vcmp.eq.f32.partialorder %v834, 0.0
        %v857 = vand.u32 %v834, 2147483648
        %v858 = vsel %vm856, %v857, %v855
        %v859 = vrcp.pop %v846
        %v860 = vmul.f32 %v846, %v859
        %v861 = vsub.f32 1.0, %v860
        %v862 = vmul.f32 %v859, %v861
        %v863 = vadd.f32 %v859, %v862
        %vm864 = vweird.f32 %v846
        %vm865 = vweird.f32 %v859
        %vm866 = vmor %vm864, %vm865
        %v867 = vsel %vm866, %v859, %v863
        %v868 = vand.u32 2147483647, %v846
        %vm869 = vcmp.eq.f32.partialorder %v868, 8.507059e+37
        %v870 = vand.u32 %v846, 2147483648
        %v871 = vor.u32 1.1754944e-38, %v870
        %v872 = vsel %vm869, %v871, %v867
        %v873 = vmul.f32 %v821, %v872
        %v874 = vrcp.pop %v858
        %v875 = vmul.f32 %v858, %v874
        %v876 = vsub.f32 1.0, %v875
        %v877 = vmul.f32 %v874, %v876
        %v878 = vadd.f32 %v874, %v877
        %vm879 = vweird.f32 %v858
        %vm880 = vweird.f32 %v874
        %vm881 = vmor %vm879, %vm880
        %v882 = vsel %vm881, %v874, %v878
        %v883 = vand.u32 2147483647, %v858
        %vm884 = vcmp.eq.f32.partialorder %v883, 8.507059e+37
        %v885 = vand.u32 %v858, 2147483648
        %v886 = vor.u32 1.1754944e-38, %v885
        %v887 = vsel %vm884, %v886, %v882
        %v888 = vmul.f32 %v822, %v887
        %s889 = scalar_lea.vmem %s4, 2
        %v890 = vld [vmem:[%s889] sm:$0x1]
        %v892 = vperm.slane %v890, 0
        %v894 = vmul.f32 %v873, %v892
        %v895 = vmul.f32 %v888, %v892
        %s896 = scalar_lea.vmem %s5, 2
        %v897 = vld [vmem:[%s896] sm:$0x1]
        %v899 = vperm.slane %v897, 0
        %v901 = vadd.f32 %v894, %v899
        %v902 = vadd.f32 %v895, %v899
        %s903 = scalar_lea.vmem [#allocation9], 32
        %v904 = vld [vmem:[%s903] sm:$0xff]
        %v905 = vld [vmem:[%s903 + $0x8] sm:$0xff]
        %s906 = scalar_lea.vmem [#allocation10], 2
        %v907 = vld [vmem:[%s906] sm:$0x1]
        %v909 = vperm.slane %v907, 0
        %v912 = vsel %vm487, %v901, 0
        %v915 = vsel %vm487, %v902, 0
        %917 = vmatpush.msra.mxu0 0.0
        %918 = vmatpush.msra.mxu0 0.0
        %919 = vmatpush.msra.mxu0 0.0
        %920 = vmatpush.msra.mxu0 0.0
        %921 = vmatpush.msra.mxu0 0.0
        %922 = vmatpush.msra.mxu0 0.0
        %923 = vmatpush.msra.mxu0 0.0
        %924 = vmatpush.msra.mxu0 0.0
        %925 = vmatpush.msra.mxu0 0.0
        %926 = vmatpush.msra.mxu0 0.0
        %927 = vmatpush.msra.mxu0 0.0
        %928 = vmatpush.msra.mxu0 0.0
        %929 = vmatpush.msra.mxu0 0.0
        %930 = vmatpush.msra.mxu0 0.0
        %931 = vmatpush.msra.mxu0 %v905
        %932 = vmatpush.msra.mxu0 %v904
        %933 = vmatmul.f32.gmra.mxu0 %v912
        %v934 = vpop.f32.mrf.mxu0
        %v935 = vadd.f32 %v909, %v934
        %936 = vmatmul.f32.gmra.mxu0 %v915
        %v937 = vpop.f32.mrf.mxu0
        %v938 = vadd.f32 %v909, %v937
        %939 = vdwg.mxu0
        %v940 = vmul.f32 %v935, %v513
        %v941 = vmul.f32 %v938, %v518
        %v942 = vmul.f32 %v647, 0.5
        %v943 = vmul.f32 %v650, 0.5
        %vm944 = vcmask 31744
        %v946 = vsel %vm944, %v942, 0
        %v949 = vsel %vm944, %v943, 0
        %v952 = vsel %vm944, %v791, 0
        %v955 = vsel %vm944, %v794, 0
        %957 = vmatpush.xpose.msra.mxu0 0.0
        %958 = vmatpush.xpose.msra.mxu0 0.0
        %959 = vmatpush.xpose.msra.mxu0 0.0
        %960 = vmatpush.xpose.msra.mxu0 0.0
        %961 = vmatpush.xpose.msra.mxu0 0.0
        %962 = vmatpush.xpose.msra.mxu0 0.0
        %963 = vmatpush.xpose.msra.mxu0 0.0
        %964 = vmatpush.xpose.msra.mxu0 0.0
        %965 = vmatpush.xpose.msra.mxu0 0.0
        %966 = vmatpush.xpose.msra.mxu0 0.0
        %967 = vmatpush.xpose.msra.mxu0 0.0
        %968 = vmatpush.xpose.msra.mxu0 0.0
        %969 = vmatpush.xpose.msra.mxu0 0.0
        %970 = vmatpush.xpose.msra.mxu0 0.0
        %971 = vmatpush.xpose.msra.mxu0 %v955
        %972 = vmatpush.xpose.msra.mxu0 %v952
        %973 = vmatmul.f32.gmra.mxu0 %v946
        %v974 = vpop.f32.mrf.mxu0
        %v975 = vadd.f32 0.0, %v974
        %976 = vmatmul.f32.gmra.mxu0 %v949
        %v977 = vpop.f32.mrf.mxu0
        %v978 = vadd.f32 0.0, %v977
        %979 = vdwg.mxu0
        %vm980 = vcmp.gt.f32.partialorder %v483, 0.0
        %v981 = vsel %vm980, 1, 0
        %v982 = vperm.slane %v981, 0
        %vm983 = vcmp.eq.s32.totalorder %v982, 1
        %v984 = vsel %vm983, %v975, -1e+30
        %v985 = vsel %vm983, %v978, -1e+30
        %v986 = vsel %vm487, %v984, -inf
        %987 = vmax.xlane.f32.xlu0 %v986
        %v988 = vpop.xlane.xlu0 %987
        %v989 = vsel %vm487, %v985, -inf
        %990 = vmax.xlane.f32.xlu0 %v989
        %v991 = vpop.xlane.xlu0 %990
        %v992 = vsub.f32 %v984, %v988
        %v993 = vsub.f32 %v985, %v991
        %v994 = vmul.f32 %v992, 1.442695
        %v995 = vpow.pop %v994
        %v996 = vmul.f32 %v993, 1.442695
        %v997 = vpow.pop %v996
        %v998 = vsel %vm487, %v995, 0.0
        %999 = vadd.xlane.f32.xlu0 %v998
        %v1000 = vpop.xlane.xlu0 %999
        %v1001 = vsel %vm487, %v997, 0.0
        %1002 = vadd.xlane.f32.xlu0 %v1001
        %v1003 = vpop.xlane.xlu0 %1002
        %v1004 = vrcp.pop %v1000
        %v1005 = vmul.f32 %v1000, %v1004
        %v1006 = vsub.f32 1.0, %v1005
        %v1007 = vmul.f32 %v1004, %v1006
        %v1008 = vadd.f32 %v1004, %v1007
        %vm1009 = vweird.f32 %v1000
        %vm1010 = vweird.f32 %v1004
        %vm1011 = vmor %vm1009, %vm1010
        %v1012 = vsel %vm1011, %v1004, %v1008
        %v1013 = vand.u32 2147483647, %v1000
        %vm1014 = vcmp.eq.f32.partialorder %v1013, 8.507059e+37
        %v1015 = vand.u32 %v1000, 2147483648
        %v1016 = vor.u32 1.1754944e-38, %v1015
        %v1017 = vsel %vm1014, %v1016, %v1012
        %v1018 = vmul.f32 %v995, %v1017
        %v1019 = vrcp.pop %v1003
        %v1020 = vmul.f32 %v1003, %v1019
        %v1021 = vsub.f32 1.0, %v1020
        %v1022 = vmul.f32 %v1019, %v1021
        %v1023 = vadd.f32 %v1019, %v1022
        %vm1024 = vweird.f32 %v1003
        %vm1025 = vweird.f32 %v1019
        %vm1026 = vmor %vm1024, %vm1025
        %v1027 = vsel %vm1026, %v1019, %v1023
        %v1028 = vand.u32 2147483647, %v1003
        %vm1029 = vcmp.eq.f32.partialorder %v1028, 8.507059e+37
        %v1030 = vand.u32 %v1003, 2147483648
        %v1031 = vor.u32 1.1754944e-38, %v1030
        %v1032 = vsel %vm1029, %v1031, %v1027
        %v1033 = vmul.f32 %v997, %v1032
        %v1035 = vsel %vm487, %v1018, 0
        %v1038 = vsel %vm487, %v1033, 0
        %1040 = vmatpush.msra.mxu0 0.0
        %1041 = vmatpush.msra.mxu0 0.0
        %1042 = vmatpush.msra.mxu0 0.0
        %1043 = vmatpush.msra.mxu0 0.0
        %1044 = vmatpush.msra.mxu0 0.0
        %1045 = vmatpush.msra.mxu0 0.0
        %1046 = vmatpush.msra.mxu0 0.0
        %1047 = vmatpush.msra.mxu0 0.0
        %1048 = vmatpush.msra.mxu0 0.0
        %1049 = vmatpush.msra.mxu0 0.0
        %1050 = vmatpush.msra.mxu0 0.0
        %1051 = vmatpush.msra.mxu0 0.0
        %1052 = vmatpush.msra.mxu0 0.0
        %1053 = vmatpush.msra.mxu0 0.0
        %1054 = vmatpush.msra.mxu0 %v941
        %1055 = vmatpush.msra.mxu0 %v940
        %1056 = vmatmul.f32.gmra.mxu0 %v1035
        %v1057 = vpop.f32.mrf.mxu0
        %v1058 = vadd.f32 0.0, %v1057
        %1059 = vmatmul.f32.gmra.mxu0 %v1038
        %v1060 = vpop.f32.mrf.mxu0
        %v1061 = vadd.f32 0.0, %v1060
        %1062 = vdwg.mxu0
        %1063 = vst.msk [vmem:[#allocation3] sm:$0xff] %vm944, %v1058
        %1064 = vst.msk [vmem:[#allocation3 + $0x8] sm:$0xff] %vm944, %v1061
        %1065 = vrot.lane.b32.xlu0 %v942, 124
        %v1066 = vpop.permute.xlu0 %1065
        %1067 = vrot.lane.b32.xlu0 %v943, 124
        %v1068 = vpop.permute.xlu0 %1067
        %1069 = vrot.lane.b32.xlu0 %v791, 124
        %v1070 = vpop.permute.xlu0 %1069
        %1071 = vrot.lane.b32.xlu0 %v794, 124
        %v1072 = vpop.permute.xlu0 %1071
        %v1073 = vsel %vm944, %v1066, 0
        %v1075 = vsel %vm944, %v1068, 0
        %v1077 = vsel %vm944, %v1070, 0
        %v1079 = vsel %vm944, %v1072, 0
        %1081 = vmatpush.xpose.msra.mxu0 0.0
        %1082 = vmatpush.xpose.msra.mxu0 0.0
        %1083 = vmatpush.xpose.msra.mxu0 0.0
        %1084 = vmatpush.xpose.msra.mxu0 0.0
        %1085 = vmatpush.xpose.msra.mxu0 0.0
        %1086 = vmatpush.xpose.msra.mxu0 0.0
        %1087 = vmatpush.xpose.msra.mxu0 0.0
        %1088 = vmatpush.xpose.msra.mxu0 0.0
        %1089 = vmatpush.xpose.msra.mxu0 0.0
        %1090 = vmatpush.xpose.msra.mxu0 0.0
        %1091 = vmatpush.xpose.msra.mxu0 0.0
        %1092 = vmatpush.xpose.msra.mxu0 0.0
        %1093 = vmatpush.xpose.msra.mxu0 0.0
        %1094 = vmatpush.xpose.msra.mxu0 0.0
        %1095 = vmatpush.xpose.msra.mxu0 %v1079
        %1096 = vmatpush.xpose.msra.mxu0 %v1077
        %1097 = vmatmul.f32.gmra.mxu0 %v1073
        %v1098 = vpop.f32.mrf.mxu0
        %v1099 = vadd.f32 0.0, %v1098
        %1100 = vmatmul.f32.gmra.mxu0 %v1075
        %v1101 = vpop.f32.mrf.mxu0
        %v1102 = vadd.f32 0.0, %v1101
        %1103 = vdwg.mxu0
        %v1104 = vsel %vm983, %v1099, -1e+30
        %v1105 = vsel %vm983, %v1102, -1e+30
        %v1106 = vsel %vm487, %v1104, -inf
        %1107 = vmax.xlane.f32.xlu0 %v1106
        %v1108 = vpop.xlane.xlu0 %1107
        %v1109 = vsel %vm487, %v1105, -inf
        %1110 = vmax.xlane.f32.xlu0 %v1109
        %v1111 = vpop.xlane.xlu0 %1110
        %v1112 = vsub.f32 %v1104, %v1108
        %v1113 = vsub.f32 %v1105, %v1111
        %v1114 = vmul.f32 %v1112, 1.442695
        %v1115 = vpow.pop %v1114
        %v1116 = vmul.f32 %v1113, 1.442695
        %v1117 = vpow.pop %v1116
        %v1118 = vsel %vm487, %v1115, 0.0
        %1119 = vadd.xlane.f32.xlu0 %v1118
        %v1120 = vpop.xlane.xlu0 %1119
        %v1121 = vsel %vm487, %v1117, 0.0
        %1122 = vadd.xlane.f32.xlu0 %v1121
        %v1123 = vpop.xlane.xlu0 %1122
        %v1124 = vrcp.pop %v1120
        %v1125 = vmul.f32 %v1120, %v1124
        %v1126 = vsub.f32 1.0, %v1125
        %v1127 = vmul.f32 %v1124, %v1126
        %v1128 = vadd.f32 %v1124, %v1127
        %vm1129 = vweird.f32 %v1120
        %vm1130 = vweird.f32 %v1124
        %vm1131 = vmor %vm1129, %vm1130
        %v1132 = vsel %vm1131, %v1124, %v1128
        %v1133 = vand.u32 2147483647, %v1120
        %vm1134 = vcmp.eq.f32.partialorder %v1133, 8.507059e+37
        %v1135 = vand.u32 %v1120, 2147483648
        %v1136 = vor.u32 1.1754944e-38, %v1135
        %v1137 = vsel %vm1134, %v1136, %v1132
        %v1138 = vmul.f32 %v1115, %v1137
        %v1139 = vrcp.pop %v1123
        %v1140 = vmul.f32 %v1123, %v1139
        %v1141 = vsub.f32 1.0, %v1140
        %v1142 = vmul.f32 %v1139, %v1141
        %v1143 = vadd.f32 %v1139, %v1142
        %vm1144 = vweird.f32 %v1123
        %vm1145 = vweird.f32 %v1139
        %vm1146 = vmor %vm1144, %vm1145
        %v1147 = vsel %vm1146, %v1139, %v1143
        %v1148 = vand.u32 2147483647, %v1123
        %vm1149 = vcmp.eq.f32.partialorder %v1148, 8.507059e+37
        %v1150 = vand.u32 %v1123, 2147483648
        %v1151 = vor.u32 1.1754944e-38, %v1150
        %v1152 = vsel %vm1149, %v1151, %v1147
        %v1153 = vmul.f32 %v1117, %v1152
        %1156 = vrot.lane.b32.xlu0 %v940, 124
        %v1157 = vpop.permute.xlu0 %1156
        %1158 = vrot.lane.b32.xlu0 %v941, 124
        %v1159 = vpop.permute.xlu0 %1158
        %v1163 = vsel %vm487, %v1138, 0
        %v1166 = vsel %vm487, %v1153, 0
        %1168 = vmatpush.msra.mxu0 0.0
        %1169 = vmatpush.msra.mxu0 0.0
        %1170 = vmatpush.msra.mxu0 0.0
        %1171 = vmatpush.msra.mxu0 0.0
        %1172 = vmatpush.msra.mxu0 0.0
        %1173 = vmatpush.msra.mxu0 0.0
        %1174 = vmatpush.msra.mxu0 0.0
        %1175 = vmatpush.msra.mxu0 0.0
        %1176 = vmatpush.msra.mxu0 0.0
        %1177 = vmatpush.msra.mxu0 0.0
        %1178 = vmatpush.msra.mxu0 0.0
        %1179 = vmatpush.msra.mxu0 0.0
        %1180 = vmatpush.msra.mxu0 0.0
        %1181 = vmatpush.msra.mxu0 0.0
        %1182 = vmatpush.msra.mxu0 %v1159
        %1183 = vmatpush.msra.mxu0 %v1157
        %1184 = vmatmul.f32.gmra.mxu0 %v1163
        %v1185 = vpop.f32.mrf.mxu0
        %v1186 = vadd.f32 0.0, %v1185
        %1187 = vmatmul.f32.gmra.mxu0 %v1166
        %v1188 = vpop.f32.mrf.mxu0
        %v1189 = vadd.f32 0.0, %v1188
        %1190 = vdwg.mxu0
        %1193 = vrot.lane.b32.xlu0 %v1186, 4
        %v1194 = vpop.permute.xlu0 %1193
        %1195 = vrot.lane.b32.xlu0 %v1189, 4
        %v1196 = vpop.permute.xlu0 %1195
        %vm1199 = vcmask 64544
        %1200 = vst.msk [vmem:[#allocation3] sm:$0xff] %vm1199, %v1194
        %1201 = vst.msk [vmem:[#allocation3 + $0x8] sm:$0xff] %vm1199, %v1196
        %1202 = vrot.lane.b32.xlu0 %v942, 120
        %v1203 = vpop.permute.xlu0 %1202
        %1204 = vrot.lane.b32.xlu0 %v943, 120
        %v1205 = vpop.permute.xlu0 %1204
        %1206 = vrot.lane.b32.xlu0 %v791, 120
        %v1207 = vpop.permute.xlu0 %1206
        %1208 = vrot.lane.b32.xlu0 %v794, 120
        %v1209 = vpop.permute.xlu0 %1208
        %v1210 = vsel %vm944, %v1203, 0
        %v1212 = vsel %vm944, %v1205, 0
        %v1214 = vsel %vm944, %v1207, 0
        %v1216 = vsel %vm944, %v1209, 0
        %1218 = vmatpush.xpose.msra.mxu0 0.0
        %1219 = vmatpush.xpose.msra.mxu0 0.0
        %1220 = vmatpush.xpose.msra.mxu0 0.0
        %1221 = vmatpush.xpose.msra.mxu0 0.0
        %1222 = vmatpush.xpose.msra.mxu0 0.0
        %1223 = vmatpush.xpose.msra.mxu0 0.0
        %1224 = vmatpush.xpose.msra.mxu0 0.0
        %1225 = vmatpush.xpose.msra.mxu0 0.0
        %1226 = vmatpush.xpose.msra.mxu0 0.0
        %1227 = vmatpush.xpose.msra.mxu0 0.0
        %1228 = vmatpush.xpose.msra.mxu0 0.0
        %1229 = vmatpush.xpose.msra.mxu0 0.0
        %1230 = vmatpush.xpose.msra.mxu0 0.0
        %1231 = vmatpush.xpose.msra.mxu0 0.0
        %1232 = vmatpush.xpose.msra.mxu0 %v1216
        %1233 = vmatpush.xpose.msra.mxu0 %v1214
        %1234 = vmatmul.f32.gmra.mxu0 %v1210
        %v1235 = vpop.f32.mrf.mxu0
        %v1236 = vadd.f32 0.0, %v1235
        %1237 = vmatmul.f32.gmra.mxu0 %v1212
        %v1238 = vpop.f32.mrf.mxu0
        %v1239 = vadd.f32 0.0, %v1238
        %1240 = vdwg.mxu0
        %v1241 = vsel %vm983, %v1236, -1e+30
        %v1242 = vsel %vm983, %v1239, -1e+30
        %v1243 = vsel %vm487, %v1241, -inf
        %1244 = vmax.xlane.f32.xlu0 %v1243
        %v1245 = vpop.xlane.xlu0 %1244
        %v1246 = vsel %vm487, %v1242, -inf
        %1247 = vmax.xlane.f32.xlu0 %v1246
        %v1248 = vpop.xlane.xlu0 %1247
        %v1249 = vsub.f32 %v1241, %v1245
        %v1250 = vsub.f32 %v1242, %v1248
        %v1251 = vmul.f32 %v1249, 1.442695
        %v1252 = vpow.pop %v1251
        %v1253 = vmul.f32 %v1250, 1.442695
        %v1254 = vpow.pop %v1253
        %v1255 = vsel %vm487, %v1252, 0.0
        %1256 = vadd.xlane.f32.xlu0 %v1255
        %v1257 = vpop.xlane.xlu0 %1256
        %v1258 = vsel %vm487, %v1254, 0.0
        %1259 = vadd.xlane.f32.xlu0 %v1258
        %v1260 = vpop.xlane.xlu0 %1259
        %v1261 = vrcp.pop %v1257
        %v1262 = vmul.f32 %v1257, %v1261
        %v1263 = vsub.f32 1.0, %v1262
        %v1264 = vmul.f32 %v1261, %v1263
        %v1265 = vadd.f32 %v1261, %v1264
        %vm1266 = vweird.f32 %v1257
        %vm1267 = vweird.f32 %v1261
        %vm1268 = vmor %vm1266, %vm1267
        %v1269 = vsel %vm1268, %v1261, %v1265
        %v1270 = vand.u32 2147483647, %v1257
        %vm1271 = vcmp.eq.f32.partialorder %v1270, 8.507059e+37
        %v1272 = vand.u32 %v1257, 2147483648
        %v1273 = vor.u32 1.1754944e-38, %v1272
        %v1274 = vsel %vm1271, %v1273, %v1269
        %v1275 = vmul.f32 %v1252, %v1274
        %v1276 = vrcp.pop %v1260
        %v1277 = vmul.f32 %v1260, %v1276
        %v1278 = vsub.f32 1.0, %v1277
        %v1279 = vmul.f32 %v1276, %v1278
        %v1280 = vadd.f32 %v1276, %v1279
        %vm1281 = vweird.f32 %v1260
        %vm1282 = vweird.f32 %v1276
        %vm1283 = vmor %vm1281, %vm1282
        %v1284 = vsel %vm1283, %v1276, %v1280
        %v1285 = vand.u32 2147483647, %v1260
        %vm1286 = vcmp.eq.f32.partialorder %v1285, 8.507059e+37
        %v1287 = vand.u32 %v1260, 2147483648
        %v1288 = vor.u32 1.1754944e-38, %v1287
        %v1289 = vsel %vm1286, %v1288, %v1284
        %v1290 = vmul.f32 %v1254, %v1289
        %1291 = vrot.lane.b32.xlu0 %v940, 120
        %v1292 = vpop.permute.xlu0 %1291
        %1293 = vrot.lane.b32.xlu0 %v941, 120
        %v1294 = vpop.permute.xlu0 %1293
        %v1298 = vsel %vm487, %v1275, 0
        %v1301 = vsel %vm487, %v1290, 0
        %1303 = vmatpush.msra.mxu0 0.0
        %1304 = vmatpush.msra.mxu0 0.0
        %1305 = vmatpush.msra.mxu0 0.0
        %1306 = vmatpush.msra.mxu0 0.0
        %1307 = vmatpush.msra.mxu0 0.0
        %1308 = vmatpush.msra.mxu0 0.0
        %1309 = vmatpush.msra.mxu0 0.0
        %1310 = vmatpush.msra.mxu0 0.0
        %1311 = vmatpush.msra.mxu0 0.0
        %1312 = vmatpush.msra.mxu0 0.0
        %1313 = vmatpush.msra.mxu0 0.0
        %1314 = vmatpush.msra.mxu0 0.0
        %1315 = vmatpush.msra.mxu0 0.0
        %1316 = vmatpush.msra.mxu0 0.0
        %1317 = vmatpush.msra.mxu0 %v1294
        %1318 = vmatpush.msra.mxu0 %v1292
        %1319 = vmatmul.f32.gmra.mxu0 %v1298
        %v1320 = vpop.f32.mrf.mxu0
        %v1321 = vadd.f32 0.0, %v1320
        %1322 = vmatmul.f32.gmra.mxu0 %v1301
        %v1323 = vpop.f32.mrf.mxu0
        %v1324 = vadd.f32 0.0, %v1323
        %1325 = vdwg.mxu0
        %1328 = vrot.lane.b32.xlu0 %v1321, 8
        %v1329 = vpop.permute.xlu0 %1328
        %1330 = vrot.lane.b32.xlu0 %v1324, 8
        %v1331 = vpop.permute.xlu0 %1330
        %vm1334 = vcmask 97344
        %1335 = vst.msk [vmem:[#allocation3] sm:$0xff] %vm1334, %v1329
        %1336 = vst.msk [vmem:[#allocation3 + $0x8] sm:$0xff] %vm1334, %v1331
        %1337 = vrot.lane.b32.xlu0 %v942, 116
        %v1338 = vpop.permute.xlu0 %1337
        %1339 = vrot.lane.b32.xlu0 %v943, 116
        %v1340 = vpop.permute.xlu0 %1339
        %1341 = vrot.lane.b32.xlu0 %v791, 116
        %v1342 = vpop.permute.xlu0 %1341
        %1343 = vrot.lane.b32.xlu0 %v794, 116
        %v1344 = vpop.permute.xlu0 %1343
        %v1345 = vsel %vm944, %v1338, 0
        %v1347 = vsel %vm944, %v1340, 0
        %v1349 = vsel %vm944, %v1342, 0
        %v1351 = vsel %vm944, %v1344, 0
        %1353 = vmatpush.xpose.msra.mxu0 0.0
        %1354 = vmatpush.xpose.msra.mxu0 0.0
        %1355 = vmatpush.xpose.msra.mxu0 0.0
        %1356 = vmatpush.xpose.msra.mxu0 0.0
        %1357 = vmatpush.xpose.msra.mxu0 0.0
        %1358 = vmatpush.xpose.msra.mxu0 0.0
        %1359 = vmatpush.xpose.msra.mxu0 0.0
        %1360 = vmatpush.xpose.msra.mxu0 0.0
        %1361 = vmatpush.xpose.msra.mxu0 0.0
        %1362 = vmatpush.xpose.msra.mxu0 0.0
        %1363 = vmatpush.xpose.msra.mxu0 0.0
        %1364 = vmatpush.xpose.msra.mxu0 0.0
        %1365 = vmatpush.xpose.msra.mxu0 0.0
        %1366 = vmatpush.xpose.msra.mxu0 0.0
        %1367 = vmatpush.xpose.msra.mxu0 %v1351
        %1368 = vmatpush.xpose.msra.mxu0 %v1349
        %1369 = vmatmul.f32.gmra.mxu0 %v1345
        %v1370 = vpop.f32.mrf.mxu0
        %v1371 = vadd.f32 0.0, %v1370
        %1372 = vmatmul.f32.gmra.mxu0 %v1347
        %v1373 = vpop.f32.mrf.mxu0
        %v1374 = vadd.f32 0.0, %v1373
        %1375 = vdwg.mxu0
        %v1376 = vsel %vm983, %v1371, -1e+30
        %v1377 = vsel %vm983, %v1374, -1e+30
        %v1378 = vsel %vm487, %v1376, -inf
        %1379 = vmax.xlane.f32.xlu0 %v1378
        %v1380 = vpop.xlane.xlu0 %1379
        %v1381 = vsel %vm487, %v1377, -inf
        %1382 = vmax.xlane.f32.xlu0 %v1381
        %v1383 = vpop.xlane.xlu0 %1382
        %v1384 = vsub.f32 %v1376, %v1380
        %v1385 = vsub.f32 %v1377, %v1383
        %v1386 = vmul.f32 %v1384, 1.442695
        %v1387 = vpow.pop %v1386
        %v1388 = vmul.f32 %v1385, 1.442695
        %v1389 = vpow.pop %v1388
        %v1390 = vsel %vm487, %v1387, 0.0
        %1391 = vadd.xlane.f32.xlu0 %v1390
        %v1392 = vpop.xlane.xlu0 %1391
        %v1393 = vsel %vm487, %v1389, 0.0
        %1394 = vadd.xlane.f32.xlu0 %v1393
        %v1395 = vpop.xlane.xlu0 %1394
        %v1396 = vrcp.pop %v1392
        %v1397 = vmul.f32 %v1392, %v1396
        %v1398 = vsub.f32 1.0, %v1397
        %v1399 = vmul.f32 %v1396, %v1398
        %v1400 = vadd.f32 %v1396, %v1399
        %vm1401 = vweird.f32 %v1392
        %vm1402 = vweird.f32 %v1396
        %vm1403 = vmor %vm1401, %vm1402
        %v1404 = vsel %vm1403, %v1396, %v1400
        %v1405 = vand.u32 2147483647, %v1392
        %vm1406 = vcmp.eq.f32.partialorder %v1405, 8.507059e+37
        %v1407 = vand.u32 %v1392, 2147483648
        %v1408 = vor.u32 1.1754944e-38, %v1407
        %v1409 = vsel %vm1406, %v1408, %v1404
        %v1410 = vmul.f32 %v1387, %v1409
        %v1411 = vrcp.pop %v1395
        %v1412 = vmul.f32 %v1395, %v1411
        %v1413 = vsub.f32 1.0, %v1412
        %v1414 = vmul.f32 %v1411, %v1413
        %v1415 = vadd.f32 %v1411, %v1414
        %vm1416 = vweird.f32 %v1395
        %vm1417 = vweird.f32 %v1411
        %vm1418 = vmor %vm1416, %vm1417
        %v1419 = vsel %vm1418, %v1411, %v1415
        %v1420 = vand.u32 2147483647, %v1395
        %vm1421 = vcmp.eq.f32.partialorder %v1420, 8.507059e+37
        %v1422 = vand.u32 %v1395, 2147483648
        %v1423 = vor.u32 1.1754944e-38, %v1422
        %v1424 = vsel %vm1421, %v1423, %v1419
        %v1425 = vmul.f32 %v1389, %v1424
        %1426 = vrot.lane.b32.xlu0 %v940, 116
        %v1427 = vpop.permute.xlu0 %1426
        %1428 = vrot.lane.b32.xlu0 %v941, 116
        %v1429 = vpop.permute.xlu0 %1428
        %v1433 = vsel %vm487, %v1410, 0
        %v1436 = vsel %vm487, %v1425, 0
        %1438 = vmatpush.msra.mxu0 0.0
        %1439 = vmatpush.msra.mxu0 0.0
        %1440 = vmatpush.msra.mxu0 0.0
        %1441 = vmatpush.msra.mxu0 0.0
        %1442 = vmatpush.msra.mxu0 0.0
        %1443 = vmatpush.msra.mxu0 0.0
        %1444 = vmatpush.msra.mxu0 0.0
        %1445 = vmatpush.msra.mxu0 0.0
        %1446 = vmatpush.msra.mxu0 0.0
        %1447 = vmatpush.msra.mxu0 0.0
        %1448 = vmatpush.msra.mxu0 0.0
        %1449 = vmatpush.msra.mxu0 0.0
        %1450 = vmatpush.msra.mxu0 0.0
        %1451 = vmatpush.msra.mxu0 0.0
        %1452 = vmatpush.msra.mxu0 %v1429
        %1453 = vmatpush.msra.mxu0 %v1427
        %1454 = vmatmul.f32.gmra.mxu0 %v1433
        %v1455 = vpop.f32.mrf.mxu0
        %v1456 = vadd.f32 0.0, %v1455
        %1457 = vmatmul.f32.gmra.mxu0 %v1436
        %v1458 = vpop.f32.mrf.mxu0
        %v1459 = vadd.f32 0.0, %v1458
        %1460 = vdwg.mxu0
        %1463 = vrot.lane.b32.xlu0 %v1456, 12
        %v1464 = vpop.permute.xlu0 %1463
        %1465 = vrot.lane.b32.xlu0 %v1459, 12
        %v1466 = vpop.permute.xlu0 %1465
        %vm1469 = vcmask 130144
        %1470 = vst.msk [vmem:[#allocation3] sm:$0xff] %vm1469, %v1464
        %1471 = vst.msk [vmem:[#allocation3 + $0x8] sm:$0xff] %vm1469, %v1466
        %v1472 = vld [vmem:[#allocation3] sm:$0xff]
        %v1473 = vld [vmem:[#allocation3 + $0x8] sm:$0xff]
        %v1474 = vld [vmem:[#allocation12] sm:$0xff]
        %v1475 = vld [vmem:[#allocation12 + $0x8] sm:$0xff]
        %v1476 = vld [vmem:[%s9] sm:$0x1]
        %v1478 = vperm.slane %v1476, 0
        %v1481 = vsel %vm487, %v1472, 0
        %v1484 = vsel %vm487, %v1473, 0
        %1486 = vmatpush.msra.mxu0 0.0
        %1487 = vmatpush.msra.mxu0 0.0
        %1488 = vmatpush.msra.mxu0 0.0
        %1489 = vmatpush.msra.mxu0 0.0
        %1490 = vmatpush.msra.mxu0 0.0
        %1491 = vmatpush.msra.mxu0 0.0
        %1492 = vmatpush.msra.mxu0 0.0
        %1493 = vmatpush.msra.mxu0 0.0
        %1494 = vmatpush.msra.mxu0 0.0
        %1495 = vmatpush.msra.mxu0 0.0
        %1496 = vmatpush.msra.mxu0 0.0
        %1497 = vmatpush.msra.mxu0 0.0
        %1498 = vmatpush.msra.mxu0 0.0
        %1499 = vmatpush.msra.mxu0 0.0
        %1500 = vmatpush.msra.mxu0 %v1475
        %1501 = vmatpush.msra.mxu0 %v1474
        %1502 = vmatmul.f32.gmra.mxu0 %v1481
        %v1503 = vpop.f32.mrf.mxu0
        %v1504 = vadd.f32 %v1478, %v1503
        %1505 = vmatmul.f32.gmra.mxu0 %v1484
        %v1506 = vpop.f32.mrf.mxu0
        %v1507 = vadd.f32 %v1478, %v1506
        %1508 = vdwg.mxu0
        %v1509 = vmul.f32 %v1504, %v513
        %v1510 = vmul.f32 %v1507, %v518
        %1511 = vst.msk [vmem:[%s468] sm:$0xff] %vm487, %v1509
        %1512 = vst.msk [vmem:[%s468 + $0x8] sm:$0xff] %vm487, %v1510
        %s1513 = sand.u32 %s262, 1
        %s1514 = scalar_lea.sflag [#allocation6], %s1513
        %s1515 = sand.u32 %s262, 1
        %s1516 = smul.addr %s1515, 16
        %s1517 = scalar_lea.vmem [#allocation13], %s1516
        // Predicated region
        $region81: #{tpu_custom_call.1} parent=59 // pred_check
          %p1518 = pneg %p272
        $region82: #{tpu_custom_call.1} parent=59 // pred_check_branch
          %1520 = sbr.rel (%p1518) target = $region84
        $region83: #{tpu_custom_call.1} parent=59 // pred_region
          %1522 = vsyncadd %s1514, 0
          %s1523 = smul.addr %s29, 2
          %s1524 = smul.addr %s1523, 8
          %s1525 = scalar_lea.hbm %s10, %s1524
          %s1526 = sshll.u32 %s1517, 4
          %s1527 = int_to_ptr.vmem [resolvable:$true] %s1526
          %s1528 = sshll.u32 %s1525, 4
          %s1529 = int_to_ptr.hbm [resolvable:$true] %s1528
          %1534 = dma.vmem_to_hbm [thread:$0]  %s1527, 256, %s1529, %s1514, 128, 128, 8
        $region84: #{tpu_custom_call.1} parent=59 // pred_fallthru
          _
      $region60: #{tpu_custom_call.1} parent=5 // pred_fallthru
        _
      %p1535 = scmp.le.s32.totalorder 2, %s24
      // Predicated region
      $region85: #{tpu_custom_call.1} parent=5 // pred_check
        %p1536 = pneg %p1535
      $region86: #{tpu_custom_call.1} parent=5 // pred_check_branch
        %1538 = sbr.rel (%p1536) target = $region88
      $region87: #{tpu_custom_call.1} parent=5 // pred_region
        %s1539 = ssub.s32 %s24, 2
        // Predicated region
        $region89: #{tpu_custom_call.1} parent=87 // pred_check
          %p1540 = pneg %p278
        $region90: #{tpu_custom_call.1} parent=87 // pred_check_branch
          %1542 = sbr.rel (%p1540) target = $region92
        $region91: #{tpu_custom_call.1} parent=87 // pred_region
          %s1543 = sand.u32 %s263, 1
          %s1544 = scalar_lea.sflag [#allocation6], %s1543
          %s1545 = sand.u32 %s263, 1
          %s1546 = smul.addr %s1545, 16
          %s1547 = scalar_lea.vmem [#allocation13], %s1546
          %1549 = dma.done %s1544, 256
        $region92: #{tpu_custom_call.1} parent=87 // pred_fallthru
          _
      $region88: #{tpu_custom_call.1} parent=5 // pred_fallthru
        _
    $region6: #{tpu_custom_call.1} parent=1 // loop_footer
      %s28 = sadd.s32 1, %s24
    $region7: #{tpu_custom_call.1} parent=1 // loop_footer_branch
      %23 = sbr.rel target = $region3
    $region8: #{tpu_custom_call.1} parent=1 // loop_exit
      _
    %1550 = vsyncpa [#allocation5], 1
    %s1551 = scalar_lea.sflag [#allocation5], 1
    %1552 = vsyncpa %s1551, 1
    %1553 = vsyncpa [#allocation8], 1
    %1554 = vsyncpa [#allocation11], 1
    %1555 = vsyncpa [#allocation6], 1
    %s1556 = scalar_lea.sflag [#allocation6], 1
    %1557 = vsyncpa %s1556, 1

</llo_original>
